<compile_context>
chip_gen: v7x
topology: tpu7x:2x2x1
jax: 0.10.0
libtpu: 0.0.40
codegen_flags: <defaults>
</compile_context>

<pallas_src>
import functools

import jax
import jax.numpy as jnp
import numpy as np
from jax.experimental import pallas as pl
from jax.experimental.pallas import tpu as pltpu

EPS = 1e-5
LANE = 128
VMEM_LIMIT = 32 * 1024 * 1024   # >= v5e default (16 MiB), == v6e/v7x default


def _round_up(v, m):
    return (v + m - 1) // m * m


# --------------------------- in-kernel helpers ------------------------------ #
def _accumulate_bn_stats(stats_ref, y, step, tile_rows, total_rows):
    """Chan/Welford merge of per-tile (mean, M2) into a resident (2, C) block.

    Row 0 = running mean, row 1 = running centered sum of squares; on the last
    grid step row 1 is converted to the biased variance.  Two-pass inside the
    tile avoids the E[x^2]-E[x]^2 cancellation of the previous kernel.
    """
    tile_mean = jnp.sum(y, axis=0, keepdims=True) * (1.0 / tile_rows)
    centered = y - tile_mean
    tile_m2 = jnp.sum(centered * centered, axis=0, keepdims=True)

    @pl.when(step == 0)
    def _():
        stats_ref[0:1, :] = tile_mean
        stats_ref[1:2, :] = tile_m2

    @pl.when(step > 0)
    def _():
        n_prev = (step * tile_rows).astype(jnp.float32)
        ratio = float(tile_rows) / (n_prev + float(tile_rows))
        mean_prev = stats_ref[0:1, :]
        delta = tile_mean - mean_prev
        stats_ref[0:1, :] = mean_prev + delta * ratio
        stats_ref[1:2, :] = (stats_ref[1:2, :] + tile_m2
                             + (delta * delta) * (n_prev * ratio))

    @pl.when(step == pl.num_programs(0) - 1)
    def _():
        stats_ref[1:2, :] = jnp.maximum(stats_ref[1:2, :] * (1.0 / total_rows), 0.0)


def _bn_affine(stats_ref, g_ref, b_ref):
    """Per-channel (scale, shift) rows from finalized (mean, var) stats."""
    mean = stats_ref[0:1, :]
    var = stats_ref[1:2, :]
    scale = jax.lax.rsqrt(var + EPS) * g_ref[...]
    return scale, b_ref[...] - mean * scale


# ------------------------------ pass 1 kernel ------------------------------- #
def _make_pass1(TB, L, Cip, Cop, K, pad, project, total_rows):
    R = TB * L

    def conv1(xp_ref, w1_ref):
        acc = jnp.zeros((R, Cop), jnp.float32)
        for k in range(K):                                   # K accumulating MXU matmuls
            tap = xp_ref[:, k:k + L, :].reshape(R, Cip)      # bf16 halo'd input tap
            acc = acc + jnp.dot(tap, w1_ref[k], preferred_element_type=jnp.float32)
        return acc

    if project:
        def kernel(xp_ref, w1_ref, ws_ref, h1_ref, s1_ref, sc_ref, ss_ref):
            i = pl.program_id(0)
            h1 = conv1(xp_ref, w1_ref)
            h1_ref[...] = h1.reshape(TB, L, Cop).astype(h1_ref.dtype)
            _accumulate_bn_stats(s1_ref, h1, i, R, total_rows)
            # centre tap of the halo'd input == the unpadded x rows
            xc = xp_ref[:, pad:pad + L, :].reshape(R, Cip)
            sc = jnp.dot(xc, ws_ref[...], preferred_element_type=jnp.float32)
            sc_ref[...] = sc.reshape(TB, L, Cop).astype(sc_ref.dtype)
            _accumulate_bn_stats(ss_ref, sc, i, R, total_rows)
        return kernel

    def kernel(xp_ref, w1_ref, h1_ref, s1_ref):
        i = pl.program_id(0)
        h1 = conv1(xp_ref, w1_ref)
        h1_ref[...] = h1.reshape(TB, L, Cop).astype(h1_ref.dtype)
        _accumulate_bn_stats(s1_ref, h1, i, R, total_rows)
    return kernel


# ------------------------------ pass 2 kernel ------------------------------- #
def _make_pass2(TB, L, Cop, K, pad, total_rows):
    R = TB * L

    def kernel(h1_ref, s1_ref, g1_ref, b1_ref, w2_ref, h2_ref, s2_ref):
        i = pl.program_id(0)
        scale1, shift1 = _bn_affine(s1_ref, g1_ref, b1_ref)
        z = jnp.maximum(
            h1_ref[...].astype(jnp.float32).reshape(R, Cop) * scale1 + shift1, 0.0)
        # local position within each sequence, for the conv2 zero-padding mask
        l_idx = jax.lax.broadcasted_iota(jnp.int32, (TB, L, Cop), 1).reshape(R, Cop)
        acc = jnp.zeros((R, Cop), jnp.float32)
        for k in range(K):                                   # K accumulating MXU matmuls
            off = k - pad
            if off == 0:
                tap = z
            else:
                # shifted tap via XLU roll + boundary mask (no halo scratch,
                # no tap concatenate); wrapped / cross-sequence rows are
                # exactly the rows the mask zeroes out.
                rolled = pltpu.roll(z, (-off) % R, 0)        # rolled[l] = z[l + off]
                valid = jnp.logical_and(l_idx + off >= 0, l_idx + off < L)
                tap = jnp.where(valid, rolled, 0.0)
            acc = acc + jnp.dot(tap.astype(jnp.bfloat16), w2_ref[k],
                                preferred_element_type=jnp.float32)
        h2_ref[...] = acc.reshape(TB, L, Cop).astype(h2_ref.dtype)
        _accumulate_bn_stats(s2_ref, acc, i, R, total_rows)

    return kernel


# ------------------------------ pass 3 kernel ------------------------------- #
def _make_pass3(TB, L, Cip, Cop, pad, project):
    R = TB * L

    if project:
        def kernel(h2_ref, s2_ref, g2_ref, b2_ref, sc_ref, ss_ref, gs_ref, bs_ref,
                   out_ref):
            scale2, shift2 = _bn_affine(s2_ref, g2_ref, b2_ref)
            h2 = h2_ref[...].astype(jnp.float32).reshape(R, Cop) * scale2 + shift2
            scales, shifts = _bn_affine(ss_ref, gs_ref, bs_ref)
            sc = sc_ref[...].astype(jnp.float32).reshape(R, Cop) * scales + shifts
            out_ref[...] = (jnp.maximum(h2 + sc, 0.0)
                            .reshape(TB, L, Cop).astype(out_ref.dtype))
        return kernel

    def kernel(h2_ref, s2_ref, g2_ref, b2_ref, xp_ref, out_ref):
        scale2, shift2 = _bn_affine(s2_ref, g2_ref, b2_ref)
        h2 = h2_ref[...].astype(jnp.float32).reshape(R, Cop) * scale2 + shift2
        # identity shortcut: centre rows of the halo'd input (Cip == Cop)
        x = xp_ref[:, pad:pad + L, :].astype(jnp.float32).reshape(R, Cip)
        out_ref[...] = (jnp.maximum(h2 + x, 0.0)
                        .reshape(TB, L, Cop).astype(out_ref.dtype))
    return kernel


# -------------------------------- wrapper ------------------------------------ #
@functools.partial(jax.jit, static_argnames=("kernel_size", "padding", "rows_per_tile"))
def residual_block(x, params, kernel_size=3, padding=1, rows_per_tile=1024):
    """x: (N, Cin, L) float32 (PyTorch NCL).  Returns (N, Cout, L) float32."""
    N, Cin, L = x.shape
    Cout = params["w1"].shape[0]
    K, pad = kernel_size, padding
    project = "ws" in params

    Cip = _round_up(Cin, LANE)
    Cop = _round_up(Cout, LANE)
    if not project:
        assert Cip == Cop, "identity shortcut needs matching padded widths"
    # TODO(synk): for Cin/Cout far below 128 the lane padding wastes MXU work;
    # a VPU broadcast-MAC path (or packing several blocks per matmul) would
    # recover that factor for small-channel configurations.

    # Row tile = TB whole sequences (largest divisor of N with TB*L <= target),
    # so the conv halo never crosses a tile boundary.
    TB = 1
    for cand in range(1, N + 1):
        if N % cand == 0 and cand * L <= max(rows_per_tile, L):
            TB = cand
    grid = (N // TB,)
    rows = N * L

    # ---- wrapper-side layout prep (transpose/pad only; NO K-fold im2col) ----
    # TODO(synk): accept channels-last input / emit channels-last output to
    # drop these XLA transposes when the surrounding model allows it.
    x_nlc = jnp.transpose(x, (0, 2, 1)).astype(jnp.bfloat16)
    x_nlc = jnp.pad(x_nlc, ((0, 0), (0, 0), (0, Cip - Cin)))
    xp = jnp.pad(x_nlc, ((0, 0), (pad, pad), (0, 0)))        # (N, L+2p, Cip) bf16

    def conv_w(w, ci, cip):   # torch (Cout, ci, K) -> (K, cip, Cop) bf16 tap slabs
        wt = jnp.transpose(w, (2, 1, 0)).astype(jnp.float32)
        wt = jnp.pad(wt, ((0, 0), (0, cip - ci), (0, Cop - Cout)))
        return wt.astype(jnp.bfloat16)

    def row(v):               # (Cout,) -> (1, Cop) f32, zero-padded
        return jnp.pad(v.astype(jnp.float32), (0, Cop - Cout)).reshape(1, Cop)

    # Conv biases are folded away: training-mode BN cancels per-channel
    # constants exactly.  TODO(synk): re-add biases if an eval-mode (running
    # stats) BN path is ever needed.
    w1 = conv_w(params["w1"], Cin, Cip)                      # (K, Cip, Cop)
    w2 = conv_w(params["w2"], Cout, Cop)                     # (K, Cop, Cop)

    # ---- BlockSpecs (auto-pipelined, double-buffered HBM<->VMEM tiles) ----
    tile3 = lambda i: (i, 0, 0)
    zero3 = lambda i: (0, 0, 0)
    zero2 = lambda i: (0, 0)
    xp_spec = pl.BlockSpec((TB, L + 2 * pad, Cip), tile3)
    act_spec = pl.BlockSpec((TB, L, Cop), tile3)
    w1_spec = pl.BlockSpec((K, Cip, Cop), zero3)
    w2_spec = pl.BlockSpec((K, Cop, Cop), zero3)
    ws_spec = pl.BlockSpec((Cip, Cop), zero2)
    row_spec = pl.BlockSpec((1, Cop), zero2)
    stats_spec = pl.BlockSpec((2, Cop), zero2)               # resident accumulator

    act_bf16 = jax.ShapeDtypeStruct((N, L, Cop), jnp.bfloat16)
    stats_f32 = jax.ShapeDtypeStruct((2, Cop), jnp.float32)

    cp_reduce = pltpu.CompilerParams(dimension_semantics=("arbitrary",),
                                     vmem_limit_bytes=VMEM_LIMIT)
    cp_parallel = pltpu.CompilerParams(dimension_semantics=("parallel",),
                                       vmem_limit_bytes=VMEM_LIMIT)

    # ----------------- pass 1: conv1 (+ proj shortcut) + stats ----------------- #
    p1_in = [xp, w1]
    p1_in_specs = [xp_spec, w1_spec]
    p1_out_shape = [act_bf16, stats_f32]
    p1_out_specs = [act_spec, stats_spec]
    flops1 = 2 * rows * K * Cip * Cop
    bytes1 = xp.size * 2 + w1.size * 2 + rows * Cop * 2 + 2 * Cop * 4
    if project:
        ws2d = jnp.pad(
            jnp.transpose(params["ws"][:, :, 0], (1, 0)).astype(jnp.float32),
            ((0, Cip - Cin), (0, Cop - Cout))).astype(jnp.bfloat16)
        p1_in.append(ws2d)
        p1_in_specs.append(ws_spec)
        p1_out_shape += [act_bf16, stats_f32]
        p1_out_specs += [act_spec, stats_spec]
        flops1 += 2 * rows * Cip * Cop
        bytes1 += ws2d.size * 2 + rows * Cop * 2 + 2 * Cop * 4

    p1 = pl.pallas_call(
        _make_pass1(TB, L, Cip, Cop, K, pad, project, rows),
        grid=grid,
        in_specs=p1_in_specs,
        out_specs=tuple(p1_out_specs),
        out_shape=tuple(p1_out_shape),
        compiler_params=cp_reduce,
        cost_estimate=pl.CostEstimate(flops=flops1, transcendentals=0,
                                      bytes_accessed=bytes1),
    )(*p1_in)
    if project:
        h1, stats1, sc, stats_s = p1
    else:
        h1, stats1 = p1

    # ----------------- pass 2: bn1 + relu + conv2 + stats ----------------- #
    flops2 = 2 * rows * K * Cop * Cop + 8 * rows * Cop
    bytes2 = 2 * rows * Cop * 2 + w2.size * 2 + 3 * 2 * Cop * 4
    h2, stats2 = pl.pallas_call(
        _make_pass2(TB, L, Cop, K, pad, rows),
        grid=grid,
        in_specs=[act_spec, stats_spec, row_spec, row_spec, w2_spec],
        out_specs=(act_spec, stats_spec),
        out_shape=(act_bf16, stats_f32),
        compiler_params=cp_reduce,
        cost_estimate=pl.CostEstimate(flops=flops2, transcendentals=0,
                                      bytes_accessed=bytes2),
    )(h1, stats1, row(params["g1"]), row(params["be1"]), w2)

    # ----------------- pass 3: bn2 + shortcut bn + add + relu ----------------- #
    p3_in = [h2, stats2, row(params["g2"]), row(params["be2"])]
    p3_in_specs = [act_spec, stats_spec, row_spec, row_spec]
    if project:
        p3_in += [sc, stats_s, row(params["gs"]), row(params["bes"])]
        p3_in_specs += [act_spec, stats_spec, row_spec, row_spec]
    else:
        p3_in.append(xp)
        p3_in_specs.append(xp_spec)
    flops3 = 8 * rows * Cop
    bytes3 = rows * Cop * (2 + 2 + 4) + 4 * Cop * 4
    out_nlc = pl.pallas_call(
        _make_pass3(TB, L, Cip, Cop, pad, project),
        grid=grid,
        in_specs=p3_in_specs,
        out_specs=pl.BlockSpec((TB, L, Cop), tile3),
        out_shape=jax.ShapeDtypeStruct((N, L, Cop), jnp.float32),
        compiler_params=cp_parallel,
        cost_estimate=pl.CostEstimate(flops=flops3, transcendentals=0,
                                      bytes_accessed=bytes3),
    )(*p3_in)

    # lane-dense (N, L, Cop) -> PyTorch NCL.  TODO(synk): defer this slice +
    # transpose (keep channels-last, padded channels are exactly zero) when the
    # downstream consumer allows it.
    return out_nlc[:, :, :Cout].transpose(0, 2, 1)


# --------------------------- pure-JAX reference ----------------------------- #
def _conv1d_ref(x, w, b, pad):
    N, Cin, L = x.shape
    K = w.shape[-1]
    xp = jnp.pad(x, ((0, 0), (0, 0), (pad, pad)))
    acc = jnp.zeros((N, w.shape[0], L), jnp.float32)
    for k in range(K):
        acc = acc + jnp.einsum("ncl,oc->nol", xp[:, :, k:k + L], w[:, :, k])
    return acc + b[None, :, None]


def _bn_ref(y, g, b):
    mean = jnp.mean(y, axis=(0, 2), keepdims=True)
    var = jnp.mean((y - mean) ** 2, axis=(0, 2), keepdims=True)
    return (y - mean) / jnp.sqrt(var + EPS) * g[None, :, None] + b[None, :, None]


def residual_block_ref(x, params, K=3, pad=1):
    h = _conv1d_ref(x, params["w1"], params["b1"], pad)
    h = jnp.maximum(_bn_ref(h, params["g1"], params["be1"]), 0.0)
    h = _conv1d_ref(h, params["w2"], params["b2"], pad)
    h = _bn_ref(h, params["g2"], params["be2"])
    if "ws" in params:
        sc = _conv1d_ref(x, params["ws"], params["bs"], 0)
        sc = _bn_ref(sc, params["gs"], params["bes"])
    else:
        sc = x
    return jnp.maximum(h + sc, 0.0)


# ------------------------------ parameters ---------------------------------- #
def init_params(key, cin, cout, K=3):
    ks = jax.random.split(key, 12)
    p = {
        "w1": 0.2 * jax.random.normal(ks[0], (cout, cin, K), jnp.float32),
        "b1": 0.1 * jax.random.normal(ks[1], (cout,), jnp.float32),
        "g1": 1.0 + 0.1 * jax.random.normal(ks[2], (cout,), jnp.float32),
        "be1": 0.1 * jax.random.normal(ks[3], (cout,), jnp.float32),
        "w2": 0.2 * jax.random.normal(ks[4], (cout, cout, K), jnp.float32),
        "b2": 0.1 * jax.random.normal(ks[5], (cout,), jnp.float32),
        "g2": 1.0 + 0.1 * jax.random.normal(ks[6], (cout,), jnp.float32),
        "be2": 0.1 * jax.random.normal(ks[7], (cout,), jnp.float32),
    }
    if cin != cout:
        p.update({
            "ws": 0.2 * jax.random.normal(ks[8], (cout, cin, 1), jnp.float32),
            "bs": 0.1 * jax.random.normal(ks[9], (cout,), jnp.float32),
            "gs": 1.0 + 0.1 * jax.random.normal(ks[10], (cout,), jnp.float32),
            "bes": 0.1 * jax.random.normal(ks[11], (cout,), jnp.float32),
        })
    return p


if __name__ == "__main__":
    key = jax.random.PRNGKey(0)
    N, L = 2, 16
    kx, kp, kx2, kp2 = jax.random.split(key, 4)

    # bf16 MXU operands / bf16 activation staging vs an all-f32 reference.
    RTOL = ATOL = 5e-2

    # Case 1: in_channels != out_channels -> projection (1x1 conv + BN) shortcut.
    # rows_per_tile=16 => 1 sequence per tile => a 2-step grid, exercising the
    # pipelined BlockSpecs and the cross-tile Welford/Chan BN-stat accumulation.
    Cin, Cout = 4, 8
    x = jax.random.normal(kx, (N, Cin, L), jnp.float32)
    params = init_params(kp, Cin, Cout)
    out = jax.block_until_ready(residual_block(x, params, rows_per_tile=16))
    ref = residual_block_ref(x, params)
    np.testing.assert_allclose(np.asarray(out), np.asarray(ref), rtol=RTOL, atol=ATOL)

    # Case 2: in_channels == out_channels -> identity shortcut.
    Cin2 = Cout2 = 8
    x2 = jax.random.normal(kx2, (N, Cin2, L), jnp.float32)
    params2 = init_params(kp2, Cin2, Cout2)
    out2 = jax.block_until_ready(residual_block(x2, params2, rows_per_tile=16))
    ref2 = residual_block_ref(x2, params2)
    np.testing.assert_allclose(np.asarray(out2), np.asarray(ref2), rtol=RTOL, atol=ATOL)

    print("KERNEL_OK")
</pallas_src>

<mosaic_0001>
module attributes {stable_mosaic.version = 11 : i64} {
  func.func @kernel(%arg0: i32, %arg1: memref<1x16x128xbf16, #tpu.memory_space<vmem>>, %arg2: memref<2x128xf32, #tpu.memory_space<vmem>>, %arg3: memref<1x128xf32, #tpu.memory_space<vmem>>, %arg4: memref<1x128xf32, #tpu.memory_space<vmem>>, %arg5: memref<3x128x128xbf16, #tpu.memory_space<vmem>>, %arg6: memref<1x16x128xbf16, #tpu.memory_space<vmem>>, %arg7: memref<2x128xf32, #tpu.memory_space<vmem>>) attributes {dimension_semantics = [#tpu.dimension_semantics<arbitrary>], iteration_bounds = array<i64: 2>, scalar_prefetch = 0 : i64, scratch_operands = 0 : i64, tpu.core_type = #tpu.core_type<tc>, window_params = [{transform_indices = @transform_0, window_bounds = array<i64: 1, 16, 128>}, {pipeline_mode = #tpu.pipeline_mode<synchronous>, transform_indices = @transform_1, window_bounds = array<i64: 2, 128>}, {pipeline_mode = #tpu.pipeline_mode<synchronous>, transform_indices = @transform_2, window_bounds = array<i64: 1, 128>}, {pipeline_mode = #tpu.pipeline_mode<synchronous>, transform_indices = @transform_3, window_bounds = array<i64: 1, 128>}, {pipeline_mode = #tpu.pipeline_mode<synchronous>, transform_indices = @transform_4, window_bounds = array<i64: 3, 128, 128>}, {transform_indices = @transform_5, window_bounds = array<i64: 1, 16, 128>}, {pipeline_mode = #tpu.pipeline_mode<synchronous>, transform_indices = @transform_6, window_bounds = array<i64: 2, 128>}]} {
    %c0 = arith.constant 0 : index
    %c0_0 = arith.constant 0 : index
    %0 = vector.load %arg2[%c0, %c0_0] : memref<2x128xf32, #tpu.memory_space<vmem>>, vector<1x128xf32>
    %c1 = arith.constant 1 : index
    %c0_1 = arith.constant 0 : index
    %1 = vector.load %arg2[%c1, %c0_1] : memref<2x128xf32, #tpu.memory_space<vmem>>, vector<1x128xf32>
    %cst = arith.constant 9.99999974E-6 : f32
    %2 = vector.broadcast %cst : f32 to vector<1x128xf32>
    %3 = arith.addf %1, %2 : vector<1x128xf32>
    %4 = math.rsqrt %3 : vector<1x128xf32>
    %c0_2 = arith.constant 0 : index
    %c0_3 = arith.constant 0 : index
    %5 = vector.load %arg3[%c0_2, %c0_3] : memref<1x128xf32, #tpu.memory_space<vmem>>, vector<1x128xf32>
    %6 = arith.mulf %4, %5 : vector<1x128xf32>
    %c0_4 = arith.constant 0 : index
    %c0_5 = arith.constant 0 : index
    %7 = vector.load %arg4[%c0_4, %c0_5] : memref<1x128xf32, #tpu.memory_space<vmem>>, vector<1x128xf32>
    %8 = arith.mulf %0, %6 : vector<1x128xf32>
    %9 = arith.subf %7, %8 : vector<1x128xf32>
    %c0_6 = arith.constant 0 : index
    %c0_7 = arith.constant 0 : index
    %c0_8 = arith.constant 0 : index
    %10 = vector.load %arg1[%c0_6, %c0_7, %c0_8] : memref<1x16x128xbf16, #tpu.memory_space<vmem>>, vector<1x16x128xbf16>
    %11 = arith.extf %10 : vector<1x16x128xbf16> to vector<1x16x128xf32>
    %12 = vector.shape_cast %11 : vector<1x16x128xf32> to vector<16x128xf32>
    %13 = vector.broadcast %6 : vector<1x128xf32> to vector<16x128xf32>
    %14 = arith.mulf %12, %13 : vector<16x128xf32>
    %15 = vector.broadcast %9 : vector<1x128xf32> to vector<16x128xf32>
    %16 = arith.addf %14, %15 : vector<16x128xf32>
    %cst_9 = arith.constant 0.000000e+00 : f32
    %17 = vector.broadcast %cst_9 : f32 to vector<16x128xf32>
    %18 = arith.maximumf %16, %17 : vector<16x128xf32>
    %19 = tpu.iota {dimensions = array<i32: 1>} : vector<1x16x128xi32>
    %20 = vector.shape_cast %19 : vector<1x16x128xi32> to vector<16x128xi32>
    %cst_10 = arith.constant 0.000000e+00 : f32
    %21 = vector.broadcast %cst_10 : f32 to vector<16x128xf32>
    %c1_i32 = arith.constant 1 : i32
    %22 = tpu.dynamic_rotate %18 by %c1_i32 dim 0 : vector<16x128xf32>, i32 -> vector<16x128xf32>
    %c-1_i32 = arith.constant -1 : i32
    %23 = vector.broadcast %c-1_i32 : i32 to vector<16x128xi32>
    %24 = arith.addi %20, %23 : vector<16x128xi32>
    %c0_i32 = arith.constant 0 : i32
    %25 = vector.broadcast %c0_i32 : i32 to vector<16x128xi32>
    %26 = arith.cmpi sge, %24, %25 : vector<16x128xi32>
    %c-1_i32_11 = arith.constant -1 : i32
    %27 = vector.broadcast %c-1_i32_11 : i32 to vector<16x128xi32>
    %28 = arith.addi %20, %27 : vector<16x128xi32>
    %c16_i32 = arith.constant 16 : i32
    %29 = vector.broadcast %c16_i32 : i32 to vector<16x128xi32>
    %30 = arith.cmpi slt, %28, %29 : vector<16x128xi32>
    %31 = arith.andi %26, %30 : vector<16x128xi1>
    %cst_12 = arith.constant 0.000000e+00 : f32
    %32 = vector.broadcast %cst_12 : f32 to vector<16x128xf32>
    %33 = arith.select %31, %22, %32 : vector<16x128xi1>, vector<16x128xf32>
    %34 = arith.truncf %33 : vector<16x128xf32> to vector<16x128xbf16>
    %c0_13 = arith.constant 0 : index
    %c0_14 = arith.constant 0 : index
    %c0_15 = arith.constant 0 : index
    %35 = vector.load %arg5[%c0_13, %c0_14, %c0_15] : memref<3x128x128xbf16, #tpu.memory_space<vmem>>, vector<1x128x128xbf16>
    %36 = vector.shape_cast %35 : vector<1x128x128xbf16> to vector<128x128xbf16>
    %cst_16 = arith.constant dense<0.000000e+00> : vector<16x128xf32>
    %37 = tpu.matmul %34, %36, %cst_16 {dimension_numbers = #tpu.dot_dimension_numbers<[1], [0], [0], [1], [0, 0, 1, 1], [], []>} : vector<16x128xbf16>, vector<128x128xbf16>, vector<16x128xf32> -> vector<16x128xf32>
    %38 = arith.addf %21, %37 : vector<16x128xf32>
    %39 = arith.truncf %18 : vector<16x128xf32> to vector<16x128xbf16>
    %c1_17 = arith.constant 1 : index
    %c0_18 = arith.constant 0 : index
    %c0_19 = arith.constant 0 : index
    %40 = vector.load %arg5[%c1_17, %c0_18, %c0_19] : memref<3x128x128xbf16, #tpu.memory_space<vmem>>, vector<1x128x128xbf16>
    %41 = vector.shape_cast %40 : vector<1x128x128xbf16> to vector<128x128xbf16>
    %cst_20 = arith.constant dense<0.000000e+00> : vector<16x128xf32>
    %42 = tpu.matmul %39, %41, %cst_20 {dimension_numbers = #tpu.dot_dimension_numbers<[1], [0], [0], [1], [0, 0, 1, 1], [], []>} : vector<16x128xbf16>, vector<128x128xbf16>, vector<16x128xf32> -> vector<16x128xf32>
    %43 = arith.addf %38, %42 : vector<16x128xf32>
    %c15_i32 = arith.constant 15 : i32
    %44 = tpu.dynamic_rotate %18 by %c15_i32 dim 0 : vector<16x128xf32>, i32 -> vector<16x128xf32>
    %c1_i32_21 = arith.constant 1 : i32
    %45 = vector.broadcast %c1_i32_21 : i32 to vector<16x128xi32>
    %46 = arith.addi %20, %45 : vector<16x128xi32>
    %c0_i32_22 = arith.constant 0 : i32
    %47 = vector.broadcast %c0_i32_22 : i32 to vector<16x128xi32>
    %48 = arith.cmpi sge, %46, %47 : vector<16x128xi32>
    %c1_i32_23 = arith.constant 1 : i32
    %49 = vector.broadcast %c1_i32_23 : i32 to vector<16x128xi32>
    %50 = arith.addi %20, %49 : vector<16x128xi32>
    %c16_i32_24 = arith.constant 16 : i32
    %51 = vector.broadcast %c16_i32_24 : i32 to vector<16x128xi32>
    %52 = arith.cmpi slt, %50, %51 : vector<16x128xi32>
    %53 = arith.andi %48, %52 : vector<16x128xi1>
    %cst_25 = arith.constant 0.000000e+00 : f32
    %54 = vector.broadcast %cst_25 : f32 to vector<16x128xf32>
    %55 = arith.select %53, %44, %54 : vector<16x128xi1>, vector<16x128xf32>
    %56 = arith.truncf %55 : vector<16x128xf32> to vector<16x128xbf16>
    %c2 = arith.constant 2 : index
    %c0_26 = arith.constant 0 : index
    %c0_27 = arith.constant 0 : index
    %57 = vector.load %arg5[%c2, %c0_26, %c0_27] : memref<3x128x128xbf16, #tpu.memory_space<vmem>>, vector<1x128x128xbf16>
    %58 = vector.shape_cast %57 : vector<1x128x128xbf16> to vector<128x128xbf16>
    %cst_28 = arith.constant dense<0.000000e+00> : vector<16x128xf32>
    %59 = tpu.matmul %56, %58, %cst_28 {dimension_numbers = #tpu.dot_dimension_numbers<[1], [0], [0], [1], [0, 0, 1, 1], [], []>} : vector<16x128xbf16>, vector<128x128xbf16>, vector<16x128xf32> -> vector<16x128xf32>
    %60 = arith.addf %43, %59 : vector<16x128xf32>
    %61 = vector.shape_cast %60 : vector<16x128xf32> to vector<1x16x128xf32>
    %62 = arith.truncf %61 : vector<1x16x128xf32> to vector<1x16x128xbf16>
    %c0_29 = arith.constant 0 : index
    %c0_30 = arith.constant 0 : index
    %c0_31 = arith.constant 0 : index
    %63 = vector.load %arg6[%c0_29, %c0_30, %c0_31] : memref<1x16x128xbf16, #tpu.memory_space<vmem>>, vector<1x16x128xbf16>
    tpu.vector_store %arg6[%c0_29, %c0_30, %c0_31], %62 {strides = array<i32>} : memref<1x16x128xbf16, #tpu.memory_space<vmem>>, vector<1x16x128xbf16>,
    %cst_32 = arith.constant dense<0.000000e+00> : vector<128xf32>
    %64 = vector.multi_reduction <add>, %60, %cst_32 [0] : vector<16x128xf32> to vector<128xf32>
    %65 = vector.shape_cast %64 : vector<128xf32> to vector<1x128xf32>
    %cst_33 = arith.constant 6.250000e-02 : f32
    %66 = vector.broadcast %cst_33 : f32 to vector<1x128xf32>
    %67 = arith.mulf %65, %66 : vector<1x128xf32>
    %68 = vector.broadcast %67 : vector<1x128xf32> to vector<16x128xf32>
    %69 = arith.subf %60, %68 : vector<16x128xf32>
    %70 = arith.mulf %69, %69 : vector<16x128xf32>
    %cst_34 = arith.constant dense<0.000000e+00> : vector<128xf32>
    %71 = vector.multi_reduction <add>, %70, %cst_34 [0] : vector<16x128xf32> to vector<128xf32>
    %72 = vector.shape_cast %71 : vector<128xf32> to vector<1x128xf32>
    %c0_i32_35 = arith.constant 0 : i32
    %73 = arith.cmpi eq, %arg0, %c0_i32_35 : i32
    %74 = arith.extui %73 : i1 to i32
    %c0_i32_36 = arith.constant 0 : i32
    %75 = arith.cmpi ne, %74, %c0_i32_36 : i32
    scf.if %75 {
      %c0_41 = arith.constant 0 : index
      %c0_42 = arith.constant 0 : index
      %82 = vector.load %arg7[%c0_41, %c0_42] : memref<2x128xf32, #tpu.memory_space<vmem>>, vector<1x128xf32>
      tpu.vector_store %arg7[%c0_41, %c0_42], %67 {strides = array<i32>} : memref<2x128xf32, #tpu.memory_space<vmem>>, vector<1x128xf32>,
      %c1_43 = arith.constant 1 : index
      %c0_44 = arith.constant 0 : index
      %83 = vector.load %arg7[%c1_43, %c0_44] : memref<2x128xf32, #tpu.memory_space<vmem>>, vector<1x128xf32>
      tpu.vector_store %arg7[%c1_43, %c0_44], %72 {strides = array<i32>} : memref<2x128xf32, #tpu.memory_space<vmem>>, vector<1x128xf32>,
    } else {
    }
    %c0_i32_37 = arith.constant 0 : i32
    %76 = arith.cmpi sgt, %arg0, %c0_i32_37 : i32
    %77 = arith.extui %76 : i1 to i32
    %c0_i32_38 = arith.constant 0 : i32
    %78 = arith.cmpi ne, %77, %c0_i32_38 : i32
    scf.if %78 {
      %c16_i32_41 = arith.constant 16 : i32
      %82 = arith.muli %arg0, %c16_i32_41 : i32
      %83 = arith.sitofp %82 : i32 to f32
      %cst_42 = arith.constant 1.600000e+01 : f32
      %84 = arith.addf %83, %cst_42 : f32
      %cst_43 = arith.constant 1.600000e+01 : f32
      %85 = arith.divf %cst_43, %84 : f32
      %c0_44 = arith.constant 0 : index
      %c0_45 = arith.constant 0 : index
      %86 = vector.load %arg7[%c0_44, %c0_45] : memref<2x128xf32, #tpu.memory_space<vmem>>, vector<1x128xf32>
      %87 = arith.subf %67, %86 : vector<1x128xf32>
      %88 = vector.broadcast %85 : f32 to vector<1x128xf32>
      %89 = arith.mulf %87, %88 : vector<1x128xf32>
      %90 = arith.addf %86, %89 : vector<1x128xf32>
      %c0_46 = arith.constant 0 : index
      %c0_47 = arith.constant 0 : index
      %91 = vector.load %arg7[%c0_46, %c0_47] : memref<2x128xf32, #tpu.memory_space<vmem>>, vector<1x128xf32>
      tpu.vector_store %arg7[%c0_46, %c0_47], %90 {strides = array<i32>} : memref<2x128xf32, #tpu.memory_space<vmem>>, vector<1x128xf32>,
      %c1_48 = arith.constant 1 : index
      %c0_49 = arith.constant 0 : index
      %92 = vector.load %arg7[%c1_48, %c0_49] : memref<2x128xf32, #tpu.memory_space<vmem>>, vector<1x128xf32>
      %93 = arith.addf %92, %72 : vector<1x128xf32>
      %94 = arith.mulf %87, %87 : vector<1x128xf32>
      %95 = arith.mulf %83, %85 : f32
      %96 = vector.broadcast %95 : f32 to vector<1x128xf32>
      %97 = arith.mulf %94, %96 : vector<1x128xf32>
      %98 = arith.addf %93, %97 : vector<1x128xf32>
      %c1_50 = arith.constant 1 : index
      %c0_51 = arith.constant 0 : index
      %99 = vector.load %arg7[%c1_50, %c0_51] : memref<2x128xf32, #tpu.memory_space<vmem>>, vector<1x128xf32>
      tpu.vector_store %arg7[%c1_50, %c0_51], %98 {strides = array<i32>} : memref<2x128xf32, #tpu.memory_space<vmem>>, vector<1x128xf32>,
    } else {
    }
    %c1_i32_39 = arith.constant 1 : i32
    %79 = arith.cmpi eq, %arg0, %c1_i32_39 : i32
    %80 = arith.extui %79 : i1 to i32
    %c0_i32_40 = arith.constant 0 : i32
    %81 = arith.cmpi ne, %80, %c0_i32_40 : i32
    scf.if %81 {
      %c1_41 = arith.constant 1 : index
      %c0_42 = arith.constant 0 : index
      %82 = vector.load %arg7[%c1_41, %c0_42] : memref<2x128xf32, #tpu.memory_space<vmem>>, vector<1x128xf32>
      %cst_43 = arith.constant 3.125000e-02 : f32
      %83 = vector.broadcast %cst_43 : f32 to vector<1x128xf32>
      %84 = arith.mulf %82, %83 : vector<1x128xf32>
      %cst_44 = arith.constant 0.000000e+00 : f32
      %85 = vector.broadcast %cst_44 : f32 to vector<1x128xf32>
      %86 = arith.maximumf %84, %85 : vector<1x128xf32>
      %c1_45 = arith.constant 1 : index
      %c0_46 = arith.constant 0 : index
      %87 = vector.load %arg7[%c1_45, %c0_46] : memref<2x128xf32, #tpu.memory_space<vmem>>, vector<1x128xf32>
      tpu.vector_store %arg7[%c1_45, %c0_46], %86 {strides = array<i32>} : memref<2x128xf32, #tpu.memory_space<vmem>>, vector<1x128xf32>,
    } else {
    }
    return
  }
  func.func @transform_0(%arg0: i32) -> (i32, i32, i32) {
    %c0_i32 = arith.constant 0 : i32
    %c0_i32_0 = arith.constant 0 : i32
    %c0_i32_1 = arith.constant 0 : i32
    return %arg0, %c0_i32, %c0_i32_0 : i32, i32, i32
  }
  func.func @transform_1(%arg0: i32) -> (i32, i32) {
    %c0_i32 = arith.constant 0 : i32
    %c0_i32_0 = arith.constant 0 : i32
    %c0_i32_1 = arith.constant 0 : i32
    return %c0_i32, %c0_i32_0 : i32, i32
  }
  func.func @transform_2(%arg0: i32) -> (i32, i32) {
    %c0_i32 = arith.constant 0 : i32
    %c0_i32_0 = arith.constant 0 : i32
    %c0_i32_1 = arith.constant 0 : i32
    return %c0_i32, %c0_i32_0 : i32, i32
  }
  func.func @transform_3(%arg0: i32) -> (i32, i32) {
    %c0_i32 = arith.constant 0 : i32
    %c0_i32_0 = arith.constant 0 : i32
    %c0_i32_1 = arith.constant 0 : i32
    return %c0_i32, %c0_i32_0 : i32, i32
  }
  func.func @transform_4(%arg0: i32) -> (i32, i32, i32) {
    %c0_i32 = arith.constant 0 : i32
    %c0_i32_0 = arith.constant 0 : i32
    %c0_i32_1 = arith.constant 0 : i32
    %c0_i32_2 = arith.constant 0 : i32
    return %c0_i32, %c0_i32_0, %c0_i32_1 : i32, i32, i32
  }
  func.func @transform_5(%arg0: i32) -> (i32, i32, i32) {
    %c0_i32 = arith.constant 0 : i32
    %c0_i32_0 = arith.constant 0 : i32
    %c0_i32_1 = arith.constant 0 : i32
    return %arg0, %c0_i32, %c0_i32_0 : i32, i32, i32
  }
  func.func @transform_6(%arg0: i32) -> (i32, i32) {
    %c0_i32 = arith.constant 0 : i32
    %c0_i32_0 = arith.constant 0 : i32
    %c0_i32_1 = arith.constant 0 : i32
    return %c0_i32, %c0_i32_0 : i32, i32
  }
}

module attributes {stable_mosaic.version = 11 : i64} {
  func.func @kernel(%arg0: i32, %arg1: memref<1x18x128xbf16, #tpu.memory_space<vmem>>, %arg2: memref<3x128x128xbf16, #tpu.memory_space<vmem>>, %arg3: memref<128x128xbf16, #tpu.memory_space<vmem>>, %arg4: memref<1x16x128xbf16, #tpu.memory_space<vmem>>, %arg5: memref<2x128xf32, #tpu.memory_space<vmem>>, %arg6: memref<1x16x128xbf16, #tpu.memory_space<vmem>>, %arg7: memref<2x128xf32, #tpu.memory_space<vmem>>) attributes {dimension_semantics = [#tpu.dimension_semantics<arbitrary>], iteration_bounds = array<i64: 2>, scalar_prefetch = 0 : i64, scratch_operands = 0 : i64, tpu.core_type = #tpu.core_type<tc>, window_params = [{transform_indices = @transform_0, window_bounds = array<i64: 1, 18, 128>}, {pipeline_mode = #tpu.pipeline_mode<synchronous>, transform_indices = @transform_1, window_bounds = array<i64: 3, 128, 128>}, {pipeline_mode = #tpu.pipeline_mode<synchronous>, transform_indices = @transform_2, window_bounds = array<i64: 128, 128>}, {transform_indices = @transform_3, window_bounds = array<i64: 1, 16, 128>}, {pipeline_mode = #tpu.pipeline_mode<synchronous>, transform_indices = @transform_4, window_bounds = array<i64: 2, 128>}, {transform_indices = @transform_5, window_bounds = array<i64: 1, 16, 128>}, {pipeline_mode = #tpu.pipeline_mode<synchronous>, transform_indices = @transform_6, window_bounds = array<i64: 2, 128>}]} {
    %cst = arith.constant 0.000000e+00 : f32
    %0 = vector.broadcast %cst : f32 to vector<16x128xf32>
    %c0 = arith.constant 0 : index
    %c0_0 = arith.constant 0 : index
    %c0_1 = arith.constant 0 : index
    %1 = vector.load %arg1[%c0, %c0_0, %c0_1] : memref<1x18x128xbf16, #tpu.memory_space<vmem>>, vector<1x16x128xbf16>
    %2 = vector.shape_cast %1 : vector<1x16x128xbf16> to vector<16x128xbf16>
    %c0_2 = arith.constant 0 : index
    %c0_3 = arith.constant 0 : index
    %c0_4 = arith.constant 0 : index
    %3 = vector.load %arg2[%c0_2, %c0_3, %c0_4] : memref<3x128x128xbf16, #tpu.memory_space<vmem>>, vector<1x128x128xbf16>
    %4 = vector.shape_cast %3 : vector<1x128x128xbf16> to vector<128x128xbf16>
    %cst_5 = arith.constant dense<0.000000e+00> : vector<16x128xf32>
    %5 = tpu.matmul %2, %4, %cst_5 {dimension_numbers = #tpu.dot_dimension_numbers<[1], [0], [0], [1], [0, 0, 1, 1], [], []>} : vector<16x128xbf16>, vector<128x128xbf16>, vector<16x128xf32> -> vector<16x128xf32>
    %6 = arith.addf %0, %5 : vector<16x128xf32>
    %c0_6 = arith.constant 0 : index
    %c1 = arith.constant 1 : index
    %c0_7 = arith.constant 0 : index
    %7 = vector.load %arg1[%c0_6, %c1, %c0_7] : memref<1x18x128xbf16, #tpu.memory_space<vmem>>, vector<1x16x128xbf16>
    %8 = vector.shape_cast %7 : vector<1x16x128xbf16> to vector<16x128xbf16>
    %c1_8 = arith.constant 1 : index
    %c0_9 = arith.constant 0 : index
    %c0_10 = arith.constant 0 : index
    %9 = vector.load %arg2[%c1_8, %c0_9, %c0_10] : memref<3x128x128xbf16, #tpu.memory_space<vmem>>, vector<1x128x128xbf16>
    %10 = vector.shape_cast %9 : vector<1x128x128xbf16> to vector<128x128xbf16>
    %cst_11 = arith.constant dense<0.000000e+00> : vector<16x128xf32>
    %11 = tpu.matmul %8, %10, %cst_11 {dimension_numbers = #tpu.dot_dimension_numbers<[1], [0], [0], [1], [0, 0, 1, 1], [], []>} : vector<16x128xbf16>, vector<128x128xbf16>, vector<16x128xf32> -> vector<16x128xf32>
    %12 = arith.addf %6, %11 : vector<16x128xf32>
    %c0_12 = arith.constant 0 : index
    %c2 = arith.constant 2 : index
    %c0_13 = arith.constant 0 : index
    %13 = vector.load %arg1[%c0_12, %c2, %c0_13] : memref<1x18x128xbf16, #tpu.memory_space<vmem>>, vector<1x16x128xbf16>
    %14 = vector.shape_cast %13 : vector<1x16x128xbf16> to vector<16x128xbf16>
    %c2_14 = arith.constant 2 : index
    %c0_15 = arith.constant 0 : index
    %c0_16 = arith.constant 0 : index
    %15 = vector.load %arg2[%c2_14, %c0_15, %c0_16] : memref<3x128x128xbf16, #tpu.memory_space<vmem>>, vector<1x128x128xbf16>
    %16 = vector.shape_cast %15 : vector<1x128x128xbf16> to vector<128x128xbf16>
    %cst_17 = arith.constant dense<0.000000e+00> : vector<16x128xf32>
    %17 = tpu.matmul %14, %16, %cst_17 {dimension_numbers = #tpu.dot_dimension_numbers<[1], [0], [0], [1], [0, 0, 1, 1], [], []>} : vector<16x128xbf16>, vector<128x128xbf16>, vector<16x128xf32> -> vector<16x128xf32>
    %18 = arith.addf %12, %17 : vector<16x128xf32>
    %19 = vector.shape_cast %18 : vector<16x128xf32> to vector<1x16x128xf32>
    %20 = arith.truncf %19 : vector<1x16x128xf32> to vector<1x16x128xbf16>
    %c0_18 = arith.constant 0 : index
    %c0_19 = arith.constant 0 : index
    %c0_20 = arith.constant 0 : index
    %21 = vector.load %arg4[%c0_18, %c0_19, %c0_20] : memref<1x16x128xbf16, #tpu.memory_space<vmem>>, vector<1x16x128xbf16>
    tpu.vector_store %arg4[%c0_18, %c0_19, %c0_20], %20 {strides = array<i32>} : memref<1x16x128xbf16, #tpu.memory_space<vmem>>, vector<1x16x128xbf16>,
    %cst_21 = arith.constant dense<0.000000e+00> : vector<128xf32>
    %22 = vector.multi_reduction <add>, %18, %cst_21 [0] : vector<16x128xf32> to vector<128xf32>
    %23 = vector.shape_cast %22 : vector<128xf32> to vector<1x128xf32>
    %cst_22 = arith.constant 6.250000e-02 : f32
    %24 = vector.broadcast %cst_22 : f32 to vector<1x128xf32>
    %25 = arith.mulf %23, %24 : vector<1x128xf32>
    %26 = vector.broadcast %25 : vector<1x128xf32> to vector<16x128xf32>
    %27 = arith.subf %18, %26 : vector<16x128xf32>
    %28 = arith.mulf %27, %27 : vector<16x128xf32>
    %cst_23 = arith.constant dense<0.000000e+00> : vector<128xf32>
    %29 = vector.multi_reduction <add>, %28, %cst_23 [0] : vector<16x128xf32> to vector<128xf32>
    %30 = vector.shape_cast %29 : vector<128xf32> to vector<1x128xf32>
    %c0_i32 = arith.constant 0 : i32
    %31 = arith.cmpi eq, %arg0, %c0_i32 : i32
    %32 = arith.extui %31 : i1 to i32
    %c0_i32_24 = arith.constant 0 : i32
    %33 = arith.cmpi ne, %32, %c0_i32_24 : i32
    scf.if %33 {
      %c0_46 = arith.constant 0 : index
      %c0_47 = arith.constant 0 : index
      %65 = vector.load %arg5[%c0_46, %c0_47] : memref<2x128xf32, #tpu.memory_space<vmem>>, vector<1x128xf32>
      tpu.vector_store %arg5[%c0_46, %c0_47], %25 {strides = array<i32>} : memref<2x128xf32, #tpu.memory_space<vmem>>, vector<1x128xf32>,
      %c1_48 = arith.constant 1 : index
      %c0_49 = arith.constant 0 : index
      %66 = vector.load %arg5[%c1_48, %c0_49] : memref<2x128xf32, #tpu.memory_space<vmem>>, vector<1x128xf32>
      tpu.vector_store %arg5[%c1_48, %c0_49], %30 {strides = array<i32>} : memref<2x128xf32, #tpu.memory_space<vmem>>, vector<1x128xf32>,
    } else {
    }
    %c0_i32_25 = arith.constant 0 : i32
    %34 = arith.cmpi sgt, %arg0, %c0_i32_25 : i32
    %35 = arith.extui %34 : i1 to i32
    %c0_i32_26 = arith.constant 0 : i32
    %36 = arith.cmpi ne, %35, %c0_i32_26 : i32
    scf.if %36 {
      %c16_i32 = arith.constant 16 : i32
      %65 = arith.muli %arg0, %c16_i32 : i32
      %66 = arith.sitofp %65 : i32 to f32
      %cst_46 = arith.constant 1.600000e+01 : f32
      %67 = arith.addf %66, %cst_46 : f32
      %cst_47 = arith.constant 1.600000e+01 : f32
      %68 = arith.divf %cst_47, %67 : f32
      %c0_48 = arith.constant 0 : index
      %c0_49 = arith.constant 0 : index
      %69 = vector.load %arg5[%c0_48, %c0_49] : memref<2x128xf32, #tpu.memory_space<vmem>>, vector<1x128xf32>
      %70 = arith.subf %25, %69 : vector<1x128xf32>
      %71 = vector.broadcast %68 : f32 to vector<1x128xf32>
      %72 = arith.mulf %70, %71 : vector<1x128xf32>
      %73 = arith.addf %69, %72 : vector<1x128xf32>
      %c0_50 = arith.constant 0 : index
      %c0_51 = arith.constant 0 : index
      %74 = vector.load %arg5[%c0_50, %c0_51] : memref<2x128xf32, #tpu.memory_space<vmem>>, vector<1x128xf32>
      tpu.vector_store %arg5[%c0_50, %c0_51], %73 {strides = array<i32>} : memref<2x128xf32, #tpu.memory_space<vmem>>, vector<1x128xf32>,
      %c1_52 = arith.constant 1 : index
      %c0_53 = arith.constant 0 : index
      %75 = vector.load %arg5[%c1_52, %c0_53] : memref<2x128xf32, #tpu.memory_space<vmem>>, vector<1x128xf32>
      %76 = arith.addf %75, %30 : vector<1x128xf32>
      %77 = arith.mulf %70, %70 : vector<1x128xf32>
      %78 = arith.mulf %66, %68 : f32
      %79 = vector.broadcast %78 : f32 to vector<1x128xf32>
      %80 = arith.mulf %77, %79 : vector<1x128xf32>
      %81 = arith.addf %76, %80 : vector<1x128xf32>
      %c1_54 = arith.constant 1 : index
      %c0_55 = arith.constant 0 : index
      %82 = vector.load %arg5[%c1_54, %c0_55] : memref<2x128xf32, #tpu.memory_space<vmem>>, vector<1x128xf32>
      tpu.vector_store %arg5[%c1_54, %c0_55], %81 {strides = array<i32>} : memref<2x128xf32, #tpu.memory_space<vmem>>, vector<1x128xf32>,
    } else {
    }
    %c1_i32 = arith.constant 1 : i32
    %37 = arith.cmpi eq, %arg0, %c1_i32 : i32
    %38 = arith.extui %37 : i1 to i32
    %c0_i32_27 = arith.constant 0 : i32
    %39 = arith.cmpi ne, %38, %c0_i32_27 : i32
    scf.if %39 {
      %c1_46 = arith.constant 1 : index
      %c0_47 = arith.constant 0 : index
      %65 = vector.load %arg5[%c1_46, %c0_47] : memref<2x128xf32, #tpu.memory_space<vmem>>, vector<1x128xf32>
      %cst_48 = arith.constant 3.125000e-02 : f32
      %66 = vector.broadcast %cst_48 : f32 to vector<1x128xf32>
      %67 = arith.mulf %65, %66 : vector<1x128xf32>
      %cst_49 = arith.constant 0.000000e+00 : f32
      %68 = vector.broadcast %cst_49 : f32 to vector<1x128xf32>
      %69 = arith.maximumf %67, %68 : vector<1x128xf32>
      %c1_50 = arith.constant 1 : index
      %c0_51 = arith.constant 0 : index
      %70 = vector.load %arg5[%c1_50, %c0_51] : memref<2x128xf32, #tpu.memory_space<vmem>>, vector<1x128xf32>
      tpu.vector_store %arg5[%c1_50, %c0_51], %69 {strides = array<i32>} : memref<2x128xf32, #tpu.memory_space<vmem>>, vector<1x128xf32>,
    } else {
    }
    %c0_28 = arith.constant 0 : index
    %c1_29 = arith.constant 1 : index
    %c0_30 = arith.constant 0 : index
    %40 = vector.load %arg1[%c0_28, %c1_29, %c0_30] : memref<1x18x128xbf16, #tpu.memory_space<vmem>>, vector<1x16x128xbf16>
    %41 = vector.shape_cast %40 : vector<1x16x128xbf16> to vector<16x128xbf16>
    %c0_31 = arith.constant 0 : index
    %c0_32 = arith.constant 0 : index
    %42 = vector.load %arg3[%c0_31, %c0_32] : memref<128x128xbf16, #tpu.memory_space<vmem>>, vector<128x128xbf16>
    %cst_33 = arith.constant dense<0.000000e+00> : vector<16x128xf32>
    %43 = tpu.matmul %41, %42, %cst_33 {dimension_numbers = #tpu.dot_dimension_numbers<[1], [0], [0], [1], [0, 0, 1, 1], [], []>} : vector<16x128xbf16>, vector<128x128xbf16>, vector<16x128xf32> -> vector<16x128xf32>
    %44 = vector.shape_cast %43 : vector<16x128xf32> to vector<1x16x128xf32>
    %45 = arith.truncf %44 : vector<1x16x128xf32> to vector<1x16x128xbf16>
    %c0_34 = arith.constant 0 : index
    %c0_35 = arith.constant 0 : index
    %c0_36 = arith.constant 0 : index
    %46 = vector.load %arg6[%c0_34, %c0_35, %c0_36] : memref<1x16x128xbf16, #tpu.memory_space<vmem>>, vector<1x16x128xbf16>
    tpu.vector_store %arg6[%c0_34, %c0_35, %c0_36], %45 {strides = array<i32>} : memref<1x16x128xbf16, #tpu.memory_space<vmem>>, vector<1x16x128xbf16>,
    %cst_37 = arith.constant dense<0.000000e+00> : vector<128xf32>
    %47 = vector.multi_reduction <add>, %43, %cst_37 [0] : vector<16x128xf32> to vector<128xf32>
    %48 = vector.shape_cast %47 : vector<128xf32> to vector<1x128xf32>
    %cst_38 = arith.constant 6.250000e-02 : f32
    %49 = vector.broadcast %cst_38 : f32 to vector<1x128xf32>
    %50 = arith.mulf %48, %49 : vector<1x128xf32>
    %51 = vector.broadcast %50 : vector<1x128xf32> to vector<16x128xf32>
    %52 = arith.subf %43, %51 : vector<16x128xf32>
    %53 = arith.mulf %52, %52 : vector<16x128xf32>
    %cst_39 = arith.constant dense<0.000000e+00> : vector<128xf32>
    %54 = vector.multi_reduction <add>, %53, %cst_39 [0] : vector<16x128xf32> to vector<128xf32>
    %55 = vector.shape_cast %54 : vector<128xf32> to vector<1x128xf32>
    %c0_i32_40 = arith.constant 0 : i32
    %56 = arith.cmpi eq, %arg0, %c0_i32_40 : i32
    %57 = arith.extui %56 : i1 to i32
    %c0_i32_41 = arith.constant 0 : i32
    %58 = arith.cmpi ne, %57, %c0_i32_41 : i32
    scf.if %58 {
      %c0_46 = arith.constant 0 : index
      %c0_47 = arith.constant 0 : index
      %65 = vector.load %arg7[%c0_46, %c0_47] : memref<2x128xf32, #tpu.memory_space<vmem>>, vector<1x128xf32>
      tpu.vector_store %arg7[%c0_46, %c0_47], %50 {strides = array<i32>} : memref<2x128xf32, #tpu.memory_space<vmem>>, vector<1x128xf32>,
      %c1_48 = arith.constant 1 : index
      %c0_49 = arith.constant 0 : index
      %66 = vector.load %arg7[%c1_48, %c0_49] : memref<2x128xf32, #tpu.memory_space<vmem>>, vector<1x128xf32>
      tpu.vector_store %arg7[%c1_48, %c0_49], %55 {strides = array<i32>} : memref<2x128xf32, #tpu.memory_space<vmem>>, vector<1x128xf32>,
    } else {
    }
    %c0_i32_42 = arith.constant 0 : i32
    %59 = arith.cmpi sgt, %arg0, %c0_i32_42 : i32
    %60 = arith.extui %59 : i1 to i32
    %c0_i32_43 = arith.constant 0 : i32
    %61 = arith.cmpi ne, %60, %c0_i32_43 : i32
    scf.if %61 {
      %c16_i32 = arith.constant 16 : i32
      %65 = arith.muli %arg0, %c16_i32 : i32
      %66 = arith.sitofp %65 : i32 to f32
      %cst_46 = arith.constant 1.600000e+01 : f32
      %67 = arith.addf %66, %cst_46 : f32
      %cst_47 = arith.constant 1.600000e+01 : f32
      %68 = arith.divf %cst_47, %67 : f32
      %c0_48 = arith.constant 0 : index
      %c0_49 = arith.constant 0 : index
      %69 = vector.load %arg7[%c0_48, %c0_49] : memref<2x128xf32, #tpu.memory_space<vmem>>, vector<1x128xf32>
      %70 = arith.subf %50, %69 : vector<1x128xf32>
      %71 = vector.broadcast %68 : f32 to vector<1x128xf32>
      %72 = arith.mulf %70, %71 : vector<1x128xf32>
      %73 = arith.addf %69, %72 : vector<1x128xf32>
      %c0_50 = arith.constant 0 : index
      %c0_51 = arith.constant 0 : index
      %74 = vector.load %arg7[%c0_50, %c0_51] : memref<2x128xf32, #tpu.memory_space<vmem>>, vector<1x128xf32>
      tpu.vector_store %arg7[%c0_50, %c0_51], %73 {strides = array<i32>} : memref<2x128xf32, #tpu.memory_space<vmem>>, vector<1x128xf32>,
      %c1_52 = arith.constant 1 : index
      %c0_53 = arith.constant 0 : index
      %75 = vector.load %arg7[%c1_52, %c0_53] : memref<2x128xf32, #tpu.memory_space<vmem>>, vector<1x128xf32>
      %76 = arith.addf %75, %55 : vector<1x128xf32>
      %77 = arith.mulf %70, %70 : vector<1x128xf32>
      %78 = arith.mulf %66, %68 : f32
      %79 = vector.broadcast %78 : f32 to vector<1x128xf32>
      %80 = arith.mulf %77, %79 : vector<1x128xf32>
      %81 = arith.addf %76, %80 : vector<1x128xf32>
      %c1_54 = arith.constant 1 : index
      %c0_55 = arith.constant 0 : index
      %82 = vector.load %arg7[%c1_54, %c0_55] : memref<2x128xf32, #tpu.memory_space<vmem>>, vector<1x128xf32>
      tpu.vector_store %arg7[%c1_54, %c0_55], %81 {strides = array<i32>} : memref<2x128xf32, #tpu.memory_space<vmem>>, vector<1x128xf32>,
    } else {
    }
    %c1_i32_44 = arith.constant 1 : i32
    %62 = arith.cmpi eq, %arg0, %c1_i32_44 : i32
    %63 = arith.extui %62 : i1 to i32
    %c0_i32_45 = arith.constant 0 : i32
    %64 = arith.cmpi ne, %63, %c0_i32_45 : i32
    scf.if %64 {
      %c1_46 = arith.constant 1 : index
      %c0_47 = arith.constant 0 : index
      %65 = vector.load %arg7[%c1_46, %c0_47] : memref<2x128xf32, #tpu.memory_space<vmem>>, vector<1x128xf32>
      %cst_48 = arith.constant 3.125000e-02 : f32
      %66 = vector.broadcast %cst_48 : f32 to vector<1x128xf32>
      %67 = arith.mulf %65, %66 : vector<1x128xf32>
      %cst_49 = arith.constant 0.000000e+00 : f32
      %68 = vector.broadcast %cst_49 : f32 to vector<1x128xf32>
      %69 = arith.maximumf %67, %68 : vector<1x128xf32>
      %c1_50 = arith.constant 1 : index
      %c0_51 = arith.constant 0 : index
      %70 = vector.load %arg7[%c1_50, %c0_51] : memref<2x128xf32, #tpu.memory_space<vmem>>, vector<1x128xf32>
      tpu.vector_store %arg7[%c1_50, %c0_51], %69 {strides = array<i32>} : memref<2x128xf32, #tpu.memory_space<vmem>>, vector<1x128xf32>,
    } else {
    }
    return
  }
  func.func @transform_0(%arg0: i32) -> (i32, i32, i32) {
    %c0_i32 = arith.constant 0 : i32
    %c0_i32_0 = arith.constant 0 : i32
    %c0_i32_1 = arith.constant 0 : i32
    return %arg0, %c0_i32, %c0_i32_0 : i32, i32, i32
  }
  func.func @transform_1(%arg0: i32) -> (i32, i32, i32) {
    %c0_i32 = arith.constant 0 : i32
    %c0_i32_0 = arith.constant 0 : i32
    %c0_i32_1 = arith.constant 0 : i32
    %c0_i32_2 = arith.constant 0 : i32
    return %c0_i32, %c0_i32_0, %c0_i32_1 : i32, i32, i32
  }
  func.func @transform_2(%arg0: i32) -> (i32, i32) {
    %c0_i32 = arith.constant 0 : i32
    %c0_i32_0 = arith.constant 0 : i32
    %c0_i32_1 = arith.constant 0 : i32
    return %c0_i32, %c0_i32_0 : i32, i32
  }
  func.func @transform_3(%arg0: i32) -> (i32, i32, i32) {
    %c0_i32 = arith.constant 0 : i32
    %c0_i32_0 = arith.constant 0 : i32
    %c0_i32_1 = arith.constant 0 : i32
    return %arg0, %c0_i32, %c0_i32_0 : i32, i32, i32
  }
  func.func @transform_4(%arg0: i32) -> (i32, i32) {
    %c0_i32 = arith.constant 0 : i32
    %c0_i32_0 = arith.constant 0 : i32
    %c0_i32_1 = arith.constant 0 : i32
    return %c0_i32, %c0_i32_0 : i32, i32
  }
  func.func @transform_5(%arg0: i32) -> (i32, i32, i32) {
    %c0_i32 = arith.constant 0 : i32
    %c0_i32_0 = arith.constant 0 : i32
    %c0_i32_1 = arith.constant 0 : i32
    return %arg0, %c0_i32, %c0_i32_0 : i32, i32, i32
  }
  func.func @transform_6(%arg0: i32) -> (i32, i32) {
    %c0_i32 = arith.constant 0 : i32
    %c0_i32_0 = arith.constant 0 : i32
    %c0_i32_1 = arith.constant 0 : i32
    return %c0_i32, %c0_i32_0 : i32, i32
  }
}

module attributes {stable_mosaic.version = 11 : i64} {
  func.func @kernel(%arg0: i32, %arg1: memref<1x16x128xbf16, #tpu.memory_space<vmem>>, %arg2: memref<2x128xf32, #tpu.memory_space<vmem>>, %arg3: memref<1x128xf32, #tpu.memory_space<vmem>>, %arg4: memref<1x128xf32, #tpu.memory_space<vmem>>, %arg5: memref<1x16x128xbf16, #tpu.memory_space<vmem>>, %arg6: memref<2x128xf32, #tpu.memory_space<vmem>>, %arg7: memref<1x128xf32, #tpu.memory_space<vmem>>, %arg8: memref<1x128xf32, #tpu.memory_space<vmem>>, %arg9: memref<1x16x128xf32, #tpu.memory_space<vmem>>) attributes {dimension_semantics = [#tpu.dimension_semantics<parallel>], iteration_bounds = array<i64: 2>, scalar_prefetch = 0 : i64, scratch_operands = 0 : i64, tpu.core_type = #tpu.core_type<tc>, window_params = [{transform_indices = @transform_0, window_bounds = array<i64: 1, 16, 128>}, {pipeline_mode = #tpu.pipeline_mode<synchronous>, transform_indices = @transform_1, window_bounds = array<i64: 2, 128>}, {pipeline_mode = #tpu.pipeline_mode<synchronous>, transform_indices = @transform_2, window_bounds = array<i64: 1, 128>}, {pipeline_mode = #tpu.pipeline_mode<synchronous>, transform_indices = @transform_3, window_bounds = array<i64: 1, 128>}, {transform_indices = @transform_4, window_bounds = array<i64: 1, 16, 128>}, {pipeline_mode = #tpu.pipeline_mode<synchronous>, transform_indices = @transform_5, window_bounds = array<i64: 2, 128>}, {pipeline_mode = #tpu.pipeline_mode<synchronous>, transform_indices = @transform_6, window_bounds = array<i64: 1, 128>}, {pipeline_mode = #tpu.pipeline_mode<synchronous>, transform_indices = @transform_7, window_bounds = array<i64: 1, 128>}, {transform_indices = @transform_8, window_bounds = array<i64: 1, 16, 128>}]} {
    %c0 = arith.constant 0 : index
    %c0_0 = arith.constant 0 : index
    %0 = vector.load %arg2[%c0, %c0_0] : memref<2x128xf32, #tpu.memory_space<vmem>>, vector<1x128xf32>
    %c1 = arith.constant 1 : index
    %c0_1 = arith.constant 0 : index
    %1 = vector.load %arg2[%c1, %c0_1] : memref<2x128xf32, #tpu.memory_space<vmem>>, vector<1x128xf32>
    %cst = arith.constant 9.99999974E-6 : f32
    %2 = vector.broadcast %cst : f32 to vector<1x128xf32>
    %3 = arith.addf %1, %2 : vector<1x128xf32>
    %4 = math.rsqrt %3 : vector<1x128xf32>
    %c0_2 = arith.constant 0 : index
    %c0_3 = arith.constant 0 : index
    %5 = vector.load %arg3[%c0_2, %c0_3] : memref<1x128xf32, #tpu.memory_space<vmem>>, vector<1x128xf32>
    %6 = arith.mulf %4, %5 : vector<1x128xf32>
    %c0_4 = arith.constant 0 : index
    %c0_5 = arith.constant 0 : index
    %7 = vector.load %arg4[%c0_4, %c0_5] : memref<1x128xf32, #tpu.memory_space<vmem>>, vector<1x128xf32>
    %8 = arith.mulf %0, %6 : vector<1x128xf32>
    %9 = arith.subf %7, %8 : vector<1x128xf32>
    %c0_6 = arith.constant 0 : index
    %c0_7 = arith.constant 0 : index
    %c0_8 = arith.constant 0 : index
    %10 = vector.load %arg1[%c0_6, %c0_7, %c0_8] : memref<1x16x128xbf16, #tpu.memory_space<vmem>>, vector<1x16x128xbf16>
    %11 = arith.extf %10 : vector<1x16x128xbf16> to vector<1x16x128xf32>
    %12 = vector.shape_cast %11 : vector<1x16x128xf32> to vector<16x128xf32>
    %13 = vector.broadcast %6 : vector<1x128xf32> to vector<16x128xf32>
    %14 = arith.mulf %12, %13 : vector<16x128xf32>
    %15 = vector.broadcast %9 : vector<1x128xf32> to vector<16x128xf32>
    %16 = arith.addf %14, %15 : vector<16x128xf32>
    %c0_9 = arith.constant 0 : index
    %c0_10 = arith.constant 0 : index
    %17 = vector.load %arg6[%c0_9, %c0_10] : memref<2x128xf32, #tpu.memory_space<vmem>>, vector<1x128xf32>
    %c1_11 = arith.constant 1 : index
    %c0_12 = arith.constant 0 : index
    %18 = vector.load %arg6[%c1_11, %c0_12] : memref<2x128xf32, #tpu.memory_space<vmem>>, vector<1x128xf32>
    %cst_13 = arith.constant 9.99999974E-6 : f32
    %19 = vector.broadcast %cst_13 : f32 to vector<1x128xf32>
    %20 = arith.addf %18, %19 : vector<1x128xf32>
    %21 = math.rsqrt %20 : vector<1x128xf32>
    %c0_14 = arith.constant 0 : index
    %c0_15 = arith.constant 0 : index
    %22 = vector.load %arg7[%c0_14, %c0_15] : memref<1x128xf32, #tpu.memory_space<vmem>>, vector<1x128xf32>
    %23 = arith.mulf %21, %22 : vector<1x128xf32>
    %c0_16 = arith.constant 0 : index
    %c0_17 = arith.constant 0 : index
    %24 = vector.load %arg8[%c0_16, %c0_17] : memref<1x128xf32, #tpu.memory_space<vmem>>, vector<1x128xf32>
    %25 = arith.mulf %17, %23 : vector<1x128xf32>
    %26 = arith.subf %24, %25 : vector<1x128xf32>
    %c0_18 = arith.constant 0 : index
    %c0_19 = arith.constant 0 : index
    %c0_20 = arith.constant 0 : index
    %27 = vector.load %arg5[%c0_18, %c0_19, %c0_20] : memref<1x16x128xbf16, #tpu.memory_space<vmem>>, vector<1x16x128xbf16>
    %28 = arith.extf %27 : vector<1x16x128xbf16> to vector<1x16x128xf32>
    %29 = vector.shape_cast %28 : vector<1x16x128xf32> to vector<16x128xf32>
    %30 = vector.broadcast %23 : vector<1x128xf32> to vector<16x128xf32>
    %31 = arith.mulf %29, %30 : vector<16x128xf32>
    %32 = vector.broadcast %26 : vector<1x128xf32> to vector<16x128xf32>
    %33 = arith.addf %31, %32 : vector<16x128xf32>
    %34 = arith.addf %16, %33 : vector<16x128xf32>
    %cst_21 = arith.constant 0.000000e+00 : f32
    %35 = vector.broadcast %cst_21 : f32 to vector<16x128xf32>
    %36 = arith.maximumf %34, %35 : vector<16x128xf32>
    %37 = vector.shape_cast %36 : vector<16x128xf32> to vector<1x16x128xf32>
    %c0_22 = arith.constant 0 : index
    %c0_23 = arith.constant 0 : index
    %c0_24 = arith.constant 0 : index
    %38 = vector.load %arg9[%c0_22, %c0_23, %c0_24] : memref<1x16x128xf32, #tpu.memory_space<vmem>>, vector<1x16x128xf32>
    tpu.vector_store %arg9[%c0_22, %c0_23, %c0_24], %37 {strides = array<i32>} : memref<1x16x128xf32, #tpu.memory_space<vmem>>, vector<1x16x128xf32>,
    return
  }
  func.func @transform_0(%arg0: i32) -> (i32, i32, i32) {
    %c0_i32 = arith.constant 0 : i32
    %c0_i32_0 = arith.constant 0 : i32
    %c0_i32_1 = arith.constant 0 : i32
    return %arg0, %c0_i32, %c0_i32_0 : i32, i32, i32
  }
  func.func @transform_1(%arg0: i32) -> (i32, i32) {
    %c0_i32 = arith.constant 0 : i32
    %c0_i32_0 = arith.constant 0 : i32
    %c0_i32_1 = arith.constant 0 : i32
    return %c0_i32, %c0_i32_0 : i32, i32
  }
  func.func @transform_2(%arg0: i32) -> (i32, i32) {
    %c0_i32 = arith.constant 0 : i32
    %c0_i32_0 = arith.constant 0 : i32
    %c0_i32_1 = arith.constant 0 : i32
    return %c0_i32, %c0_i32_0 : i32, i32
  }
  func.func @transform_3(%arg0: i32) -> (i32, i32) {
    %c0_i32 = arith.constant 0 : i32
    %c0_i32_0 = arith.constant 0 : i32
    %c0_i32_1 = arith.constant 0 : i32
    return %c0_i32, %c0_i32_0 : i32, i32
  }
  func.func @transform_4(%arg0: i32) -> (i32, i32, i32) {
    %c0_i32 = arith.constant 0 : i32
    %c0_i32_0 = arith.constant 0 : i32
    %c0_i32_1 = arith.constant 0 : i32
    return %arg0, %c0_i32, %c0_i32_0 : i32, i32, i32
  }
  func.func @transform_5(%arg0: i32) -> (i32, i32) {
    %c0_i32 = arith.constant 0 : i32
    %c0_i32_0 = arith.constant 0 : i32
    %c0_i32_1 = arith.constant 0 : i32
    return %c0_i32, %c0_i32_0 : i32, i32
  }
  func.func @transform_6(%arg0: i32) -> (i32, i32) {
    %c0_i32 = arith.constant 0 : i32
    %c0_i32_0 = arith.constant 0 : i32
    %c0_i32_1 = arith.constant 0 : i32
    return %c0_i32, %c0_i32_0 : i32, i32
  }
  func.func @transform_7(%arg0: i32) -> (i32, i32) {
    %c0_i32 = arith.constant 0 : i32
    %c0_i32_0 = arith.constant 0 : i32
    %c0_i32_1 = arith.constant 0 : i32
    return %c0_i32, %c0_i32_0 : i32, i32
  }
  func.func @transform_8(%arg0: i32) -> (i32, i32, i32) {
    %c0_i32 = arith.constant 0 : i32
    %c0_i32_0 = arith.constant 0 : i32
    %c0_i32_1 = arith.constant 0 : i32
    return %arg0, %c0_i32, %c0_i32_0 : i32, i32, i32
  }
}

</mosaic_0001>

<llo_original>
// kernel: residual_block.5
$region0: #{residual_block.5}
  #allocation0 [shape = 'u32[]', space=smem, size = 0x4, offset = 0x4, fixed_abs, tag = 'smem constant byte address 0x4 - core index']
  #allocation1 [shape = 'u32[144,128]{1,0:T(1,128)}', space=vmem, size = 0x12000, scoped, tag = 'internal scratch']
  %s0 = inlined_call_operand.vmem [shape: bf16[2,16,128], index: 0, kind: input, shape index: {}]
  %s1 = inlined_call_operand.vmem [shape: f32[2,128], index: 1, kind: input, shape index: {}]
  %s2 = inlined_call_operand.vmem [shape: f32[1,128], index: 2, kind: input, shape index: {}]
  %s3 = inlined_call_operand.vmem [shape: f32[1,128], index: 3, kind: input, shape index: {}]
  %s4 = inlined_call_operand.vmem [shape: bf16[2,16,128], index: 4, kind: input, shape index: {}]
  %s5 = inlined_call_operand.vmem [shape: f32[2,128], index: 5, kind: input, shape index: {}]
  %s6 = inlined_call_operand.vmem [shape: f32[1,128], index: 6, kind: input, shape index: {}]
  %s7 = inlined_call_operand.vmem [shape: f32[1,128], index: 7, kind: input, shape index: {}]
  %s8 = inlined_call_operand.vmem [shape: f32[2,16,128], index: 8, kind: output, shape index: {}]
  %s9 = sld [smem:[#allocation0]]
  $region65: #{residual_block.5} parent=0
    _
  %s11 = ssub.s32 1, %s9
  %s12 = scalar_select 0, %s11, %s9
  loop: start=0, step=1, limit=4
  $region2: #{residual_block.5} parent=0 // loop_pre_header
    _
  $region3: #{residual_block.5} parent=0 // loop_header
    %s14 = sphi 0, %s18
    %p15 = scmp.ge.s32.totalorder %s14, 4
    %s24 = sphi 0, %s26
    %s27 = sphi 0, %s24
    %s28 = sphi 0, %s27
    %s44 = sphi 0, %s28
    %s48 = sphi 0, %s48
    %s50 = sphi 0, %s48
    %s51 = sphi 0, %s50
    %s65 = sphi 0, %s51
    %s69 = sphi 0, %s69
    %s71 = sphi 0, %s69
    %s72 = sphi 0, %s71
    %s86 = sphi 0, %s72
    %s90 = sphi 0, %s90
    %s92 = sphi 0, %s90
    %s93 = sphi 0, %s92
    %s107 = sphi 0, %s93
    %s113 = sphi 0, %s115
    %s116 = sphi 0, %s113
    %s117 = sphi 0, %s116
    %s133 = sphi 0, %s117
    %s137 = sphi 0, %s137
    %s139 = sphi 0, %s137
    %s140 = sphi 0, %s139
    %s154 = sphi 0, %s140
    %s158 = sphi 0, %s158
    %s160 = sphi 0, %s158
    %s161 = sphi 0, %s160
    %s175 = sphi 0, %s161
    %s179 = sphi 0, %s179
    %s181 = sphi 0, %s179
    %s182 = sphi 0, %s181
    %s196 = sphi 0, %s182
    %s202 = sphi 0, %s204
    %s205 = sphi 0, %s202
    %s206 = sphi 0, %s205
    %s222 = sphi 0, %s206
  $region4: #{residual_block.5} parent=0 // loop_header_branch
    %17 = sbr.rel (%p15) target = $region8
  $region5: #{residual_block.5} parent=0 // loop_body
    %s19 = ssub.s32 %s14, 1
    %s20 = ssub.s32 %s14, 2
    %s21 = sadd.s32 %s14, 1
    %s22 = ssub.s32 %s14, %s21
    %p23 = scmp.eq.s32.totalorder %s22, 0
    %s25 = sadd.s32 %s24, 1
    %s26 = scalar_select %p23, %s24, %s25
    %p29 = pneg %p23
    %p30 = scmp.eq.s32.totalorder %s14, 1
    %p31 = por %p29, %p30
    %p32 = scmp.ne.s32.totalorder %s24, %s27
    %p33 = scmp.eq.s32.totalorder %s14, 0
    %p34 = por %p32, %p33
    %p35 = scmp.ne.s32.totalorder %s24, %s27
    %p36 = scmp.eq.s32.totalorder %s19, 1
    %p37 = por %p35, %p36
    %p38 = scmp.ne.s32.totalorder %s27, %s28
    %p39 = scmp.eq.s32.totalorder %s19, 0
    %p40 = por %p38, %p39
    %p41 = scmp.ne.s32.totalorder %s27, %s28
    %p42 = scmp.eq.s32.totalorder %s20, 1
    %p43 = por %p41, %p42
    %p45 = scmp.ne.s32.totalorder %s28, %s44
    %p46 = scmp.eq.s32.totalorder %s20, 0
    %p47 = por %p45, %p46
    %s49 = sadd.s32 %s48, 1
    %p52 = scmp.eq.s32.totalorder %s14, 1
    %p53 = scmp.ne.s32.totalorder %s48, %s50
    %p54 = scmp.eq.s32.totalorder %s14, 0
    %p55 = por %p53, %p54
    %p56 = scmp.ne.s32.totalorder %s48, %s50
    %p57 = scmp.eq.s32.totalorder %s19, 1
    %p58 = por %p56, %p57
    %p59 = scmp.ne.s32.totalorder %s50, %s51
    %p60 = scmp.eq.s32.totalorder %s19, 0
    %p61 = por %p59, %p60
    %p62 = scmp.ne.s32.totalorder %s50, %s51
    %p63 = scmp.eq.s32.totalorder %s20, 1
    %p64 = por %p62, %p63
    %p66 = scmp.ne.s32.totalorder %s51, %s65
    %p67 = scmp.eq.s32.totalorder %s20, 0
    %p68 = por %p66, %p67
    %s70 = sadd.s32 %s69, 1
    %p73 = scmp.eq.s32.totalorder %s14, 1
    %p74 = scmp.ne.s32.totalorder %s69, %s71
    %p75 = scmp.eq.s32.totalorder %s14, 0
    %p76 = por %p74, %p75
    %p77 = scmp.ne.s32.totalorder %s69, %s71
    %p78 = scmp.eq.s32.totalorder %s19, 1
    %p79 = por %p77, %p78
    %p80 = scmp.ne.s32.totalorder %s71, %s72
    %p81 = scmp.eq.s32.totalorder %s19, 0
    %p82 = por %p80, %p81
    %p83 = scmp.ne.s32.totalorder %s71, %s72
    %p84 = scmp.eq.s32.totalorder %s20, 1
    %p85 = por %p83, %p84
    %p87 = scmp.ne.s32.totalorder %s72, %s86
    %p88 = scmp.eq.s32.totalorder %s20, 0
    %p89 = por %p87, %p88
    %s91 = sadd.s32 %s90, 1
    %p94 = scmp.eq.s32.totalorder %s14, 1
    %p95 = scmp.ne.s32.totalorder %s90, %s92
    %p96 = scmp.eq.s32.totalorder %s14, 0
    %p97 = por %p95, %p96
    %p98 = scmp.ne.s32.totalorder %s90, %s92
    %p99 = scmp.eq.s32.totalorder %s19, 1
    %p100 = por %p98, %p99
    %p101 = scmp.ne.s32.totalorder %s92, %s93
    %p102 = scmp.eq.s32.totalorder %s19, 0
    %p103 = por %p101, %p102
    %p104 = scmp.ne.s32.totalorder %s92, %s93
    %p105 = scmp.eq.s32.totalorder %s20, 1
    %p106 = por %p104, %p105
    %p108 = scmp.ne.s32.totalorder %s93, %s107
    %p109 = scmp.eq.s32.totalorder %s20, 0
    %p110 = por %p108, %p109
    %s111 = ssub.s32 %s14, %s21
    %p112 = scmp.eq.s32.totalorder %s111, 0
    %s114 = sadd.s32 %s113, 1
    %s115 = scalar_select %p112, %s113, %s114
    %p118 = pneg %p112
    %p119 = scmp.eq.s32.totalorder %s14, 1
    %p120 = por %p118, %p119
    %p121 = scmp.ne.s32.totalorder %s113, %s116
    %p122 = scmp.eq.s32.totalorder %s14, 0
    %p123 = por %p121, %p122
    %p124 = scmp.ne.s32.totalorder %s113, %s116
    %p125 = scmp.eq.s32.totalorder %s19, 1
    %p126 = por %p124, %p125
    %p127 = scmp.ne.s32.totalorder %s116, %s117
    %p128 = scmp.eq.s32.totalorder %s19, 0
    %p129 = por %p127, %p128
    %p130 = scmp.ne.s32.totalorder %s116, %s117
    %p131 = scmp.eq.s32.totalorder %s20, 1
    %p132 = por %p130, %p131
    %p134 = scmp.ne.s32.totalorder %s117, %s133
    %p135 = scmp.eq.s32.totalorder %s20, 0
    %p136 = por %p134, %p135
    %s138 = sadd.s32 %s137, 1
    %p141 = scmp.eq.s32.totalorder %s14, 1
    %p142 = scmp.ne.s32.totalorder %s137, %s139
    %p143 = scmp.eq.s32.totalorder %s14, 0
    %p144 = por %p142, %p143
    %p145 = scmp.ne.s32.totalorder %s137, %s139
    %p146 = scmp.eq.s32.totalorder %s19, 1
    %p147 = por %p145, %p146
    %p148 = scmp.ne.s32.totalorder %s139, %s140
    %p149 = scmp.eq.s32.totalorder %s19, 0
    %p150 = por %p148, %p149
    %p151 = scmp.ne.s32.totalorder %s139, %s140
    %p152 = scmp.eq.s32.totalorder %s20, 1
    %p153 = por %p151, %p152
    %p155 = scmp.ne.s32.totalorder %s140, %s154
    %p156 = scmp.eq.s32.totalorder %s20, 0
    %p157 = por %p155, %p156
    %s159 = sadd.s32 %s158, 1
    %p162 = scmp.eq.s32.totalorder %s14, 1
    %p163 = scmp.ne.s32.totalorder %s158, %s160
    %p164 = scmp.eq.s32.totalorder %s14, 0
    %p165 = por %p163, %p164
    %p166 = scmp.ne.s32.totalorder %s158, %s160
    %p167 = scmp.eq.s32.totalorder %s19, 1
    %p168 = por %p166, %p167
    %p169 = scmp.ne.s32.totalorder %s160, %s161
    %p170 = scmp.eq.s32.totalorder %s19, 0
    %p171 = por %p169, %p170
    %p172 = scmp.ne.s32.totalorder %s160, %s161
    %p173 = scmp.eq.s32.totalorder %s20, 1
    %p174 = por %p172, %p173
    %p176 = scmp.ne.s32.totalorder %s161, %s175
    %p177 = scmp.eq.s32.totalorder %s20, 0
    %p178 = por %p176, %p177
    %s180 = sadd.s32 %s179, 1
    %p183 = scmp.eq.s32.totalorder %s14, 1
    %p184 = scmp.ne.s32.totalorder %s179, %s181
    %p185 = scmp.eq.s32.totalorder %s14, 0
    %p186 = por %p184, %p185
    %p187 = scmp.ne.s32.totalorder %s179, %s181
    %p188 = scmp.eq.s32.totalorder %s19, 1
    %p189 = por %p187, %p188
    %p190 = scmp.ne.s32.totalorder %s181, %s182
    %p191 = scmp.eq.s32.totalorder %s19, 0
    %p192 = por %p190, %p191
    %p193 = scmp.ne.s32.totalorder %s181, %s182
    %p194 = scmp.eq.s32.totalorder %s20, 1
    %p195 = por %p193, %p194
    %p197 = scmp.ne.s32.totalorder %s182, %s196
    %p198 = scmp.eq.s32.totalorder %s20, 0
    %p199 = por %p197, %p198
    %s200 = ssub.s32 %s14, %s21
    %p201 = scmp.eq.s32.totalorder %s200, 0
    %s203 = sadd.s32 %s202, 1
    %s204 = scalar_select %p201, %s202, %s203
    %p207 = pneg %p201
    %p208 = scmp.eq.s32.totalorder %s14, 1
    %p209 = por %p207, %p208
    %p210 = scmp.ne.s32.totalorder %s202, %s205
    %p211 = scmp.eq.s32.totalorder %s14, 0
    %p212 = por %p210, %p211
    %p213 = scmp.ne.s32.totalorder %s202, %s205
    %p214 = scmp.eq.s32.totalorder %s19, 1
    %p215 = por %p213, %p214
    %p216 = scmp.ne.s32.totalorder %s205, %s206
    %p217 = scmp.eq.s32.totalorder %s19, 0
    %p218 = por %p216, %p217
    %p219 = scmp.ne.s32.totalorder %s205, %s206
    %p220 = scmp.eq.s32.totalorder %s20, 1
    %p221 = por %p219, %p220
    %p223 = scmp.ne.s32.totalorder %s206, %s222
    %p224 = scmp.eq.s32.totalorder %s20, 0
    %p225 = por %p223, %p224
    %p226 = scmp.le.s32.totalorder 1, %s14
    %p227 = scmp.lt.s32.totalorder %s14, 3
    %p228 = pnand %p226, %p227
    %p229 = pneg %p228
    // Predicated region
    $region9: #{residual_block.5} parent=5 // pred_check
      _
    $region10: #{residual_block.5} parent=5 // pred_check_branch
      %231 = sbr.rel (%p228) target = $region12
    $region11: #{residual_block.5} parent=5 // pred_region
      %s232 = ssub.s32 %s14, 1
      // Predicated region
      $region13: #{residual_block.5} parent=11 // pred_check
        %p233 = pneg %p61
      $region14: #{residual_block.5} parent=11 // pred_check_branch
        %235 = sbr.rel (%p233) target = $region16
      $region15: #{residual_block.5} parent=11 // pred_region
        _
      $region16: #{residual_block.5} parent=11 // pred_fallthru
        _
      // Predicated region
      $region17: #{residual_block.5} parent=11 // pred_check
        %p236 = pneg %p82
      $region18: #{residual_block.5} parent=11 // pred_check_branch
        %238 = sbr.rel (%p236) target = $region20
      $region19: #{residual_block.5} parent=11 // pred_region
        _
      $region20: #{residual_block.5} parent=11 // pred_fallthru
        _
      // Predicated region
      $region21: #{residual_block.5} parent=11 // pred_check
        %p239 = pneg %p103
      $region22: #{residual_block.5} parent=11 // pred_check_branch
        %241 = sbr.rel (%p239) target = $region24
      $region23: #{residual_block.5} parent=11 // pred_region
        _
      $region24: #{residual_block.5} parent=11 // pred_fallthru
        _
      // Predicated region
      $region25: #{residual_block.5} parent=11 // pred_check
        %p242 = pneg %p150
      $region26: #{residual_block.5} parent=11 // pred_check_branch
        %244 = sbr.rel (%p242) target = $region28
      $region27: #{residual_block.5} parent=11 // pred_region
        _
      $region28: #{residual_block.5} parent=11 // pred_fallthru
        _
      // Predicated region
      $region29: #{residual_block.5} parent=11 // pred_check
        %p245 = pneg %p171
      $region30: #{residual_block.5} parent=11 // pred_check_branch
        %247 = sbr.rel (%p245) target = $region32
      $region31: #{residual_block.5} parent=11 // pred_region
        _
      $region32: #{residual_block.5} parent=11 // pred_fallthru
        _
      // Predicated region
      $region33: #{residual_block.5} parent=11 // pred_check
        %p248 = pneg %p192
      $region34: #{residual_block.5} parent=11 // pred_check_branch
        %250 = sbr.rel (%p248) target = $region36
      $region35: #{residual_block.5} parent=11 // pred_region
        _
      $region36: #{residual_block.5} parent=11 // pred_fallthru
        _
    $region12: #{residual_block.5} parent=5 // pred_fallthru
      _
    %p251 = scmp.lt.s32.totalorder %s14, 2
    // Predicated region
    $region37: #{residual_block.5} parent=5 // pred_check
      %p252 = pneg %p251
    $region38: #{residual_block.5} parent=5 // pred_check_branch
      %254 = sbr.rel (%p252) target = $region40
    $region39: #{residual_block.5} parent=5 // pred_region
      // Predicated region
      $region41: #{residual_block.5} parent=39 // pred_check
        %p255 = pneg %p34
      $region42: #{residual_block.5} parent=39 // pred_check_branch
        %257 = sbr.rel (%p255) target = $region44
      $region43: #{residual_block.5} parent=39 // pred_region
        %p258 = scmp.lt.s32.totalorder %s14, 1
        %s259 = scalar_select %p258, %s14, 1
        %s260 = smul.addr %s259, 2
        %s261 = smul.addr %s260, 4
        %s262 = scalar_lea.vmem %s0, %s261
      $region44: #{residual_block.5} parent=39 // pred_fallthru
        _
      // Predicated region
      $region45: #{residual_block.5} parent=39 // pred_check
        %p263 = pneg %p123
      $region46: #{residual_block.5} parent=39 // pred_check_branch
        %265 = sbr.rel (%p263) target = $region48
      $region47: #{residual_block.5} parent=39 // pred_region
        %p266 = scmp.lt.s32.totalorder %s14, 1
        %s267 = scalar_select %p266, %s14, 1
        %s268 = smul.addr %s267, 2
        %s269 = smul.addr %s268, 4
        %s270 = scalar_lea.vmem %s4, %s269
      $region48: #{residual_block.5} parent=39 // pred_fallthru
        _
    $region40: #{residual_block.5} parent=5 // pred_fallthru
      _
    %p271 = scmp.le.s32.totalorder 1, %s14
    %p272 = scmp.lt.s32.totalorder %s14, 3
    %p273 = pnand %p271, %p272
    %p274 = pneg %p273
    // Predicated region
    $region49: #{residual_block.5} parent=5 // pred_check
      _
    $region50: #{residual_block.5} parent=5 // pred_check_branch
      %276 = sbr.rel (%p273) target = $region52
    $region51: #{residual_block.5} parent=5 // pred_region
      %s277 = ssub.s32 %s14, 1
      %p278 = scmp.lt.s32.totalorder %s19, 1
      %s279 = scalar_select %p278, %s19, 1
      %s280 = smul.addr %s279, 2
      %s281 = smul.addr %s280, 4
      %s282 = scalar_lea.vmem %s0, %s281
      %p283 = pneg %p40
      %p284 = pneg %p37
      %p285 = pneg %p61
      %p286 = pneg %p58
      %p287 = pneg %p82
      %p288 = pneg %p79
      %p289 = pneg %p103
      %p290 = pneg %p100
      %p291 = scmp.lt.s32.totalorder %s19, 1
      %s292 = scalar_select %p291, %s19, 1
      %s293 = smul.addr %s292, 2
      %s294 = smul.addr %s293, 4
      %s295 = scalar_lea.vmem %s4, %s294
      %p296 = pneg %p129
      %p297 = pneg %p126
      %p298 = pneg %p150
      %p299 = pneg %p147
      %p300 = pneg %p171
      %p301 = pneg %p168
      %p302 = pneg %p192
      %p303 = pneg %p189
      %p304 = pneg %p218
      %p305 = pneg %p215
      %p306 = scmp.lt.s32.totalorder %s19, 1
      %s307 = scalar_select %p306, %s19, 1
      %s308 = smul.addr %s307, 2
      %s309 = smul.addr %s308, 8
      %s310 = scalar_lea.vmem %s8, %s309
      %p311 = scmp.lt.s32.totalorder %s19, 1
      %s312 = scalar_select %p311, %s19, 1
      %s313 = smul.addr %s312, 2
      %s314 = smul.addr %s313, 4
      %s315 = scalar_lea.vmem %s0, %s314
      %p316 = scmp.lt.s32.totalorder %s19, 1
      %s317 = scalar_select %p316, %s19, 1
      %s318 = smul.addr %s317, 2
      %s319 = smul.addr %s318, 4
      %s320 = scalar_lea.vmem %s4, %s319
      %p321 = scmp.lt.s32.totalorder %s19, 1
      %s322 = scalar_select %p321, %s19, 1
      %s323 = smul.addr %s322, 2
      %s324 = smul.addr %s323, 8
      %s325 = scalar_lea.vmem %s8, %s324
      %v326 = vld [vmem:[%s1] sm:$0x1]
      %v327 = vld [vmem:[%s1 + $0x1] sm:$0x1]
      %v328 = vadd.f32 %v327, 1e-05
      %v329 = vrsqrt.pop %v328
      %v330 = vld [vmem:[%s2] sm:$0x1]
      %v331 = vmul.f32 %v329, %v330
      %v332 = vld [vmem:[%s3] sm:$0x1]
      %v333 = vmul.f32 %v326, %v331
      %v334 = vsub.f32 %v332, %v333
      %v335 = vld [vmem:[%s315] sm:$0xf]
      %v336 = vld [vmem:[%s315 + $0x4] sm:$0xf]
      %v337 = vunpack.c.l.bf16 %v335
      %v338 = vunpack.c.l.bf16 %v336
      %v339 = vlaneseq
      %v340 = vshrl.u32 %v339, 7
      %v341 = vsub.s32 0, %v340
      %v342 = vrot.slane %v331, %v341
      %v343 = vmul.f32 %v337, %v342
      %v344 = vmul.f32 %v338, %v342
      %v346 = vlaneseq
      %v347 = vshrl.u32 %v346, 7
      %v348 = vsub.s32 0, %v347
      %v349 = vrot.slane %v334, %v348
      %v351 = vadd.f32 %v343, %v349
      %v352 = vadd.f32 %v344, %v349
      %v353 = vld [vmem:[%s5] sm:$0x1]
      %v354 = vld [vmem:[%s5 + $0x1] sm:$0x1]
      %v355 = vadd.f32 %v354, 1e-05
      %v356 = vrsqrt.pop %v355
      %v357 = vld [vmem:[%s6] sm:$0x1]
      %v358 = vmul.f32 %v356, %v357
      %v359 = vld [vmem:[%s7] sm:$0x1]
      %v360 = vmul.f32 %v353, %v358
      %v361 = vsub.f32 %v359, %v360
      %v362 = vld [vmem:[%s320] sm:$0xf]
      %v363 = vld [vmem:[%s320 + $0x4] sm:$0xf]
      %v364 = vunpack.c.l.bf16 %v362
      %v365 = vunpack.c.l.bf16 %v363
      %v366 = vlaneseq
      %v367 = vshrl.u32 %v366, 7
      %v368 = vsub.s32 0, %v367
      %v369 = vrot.slane %v358, %v368
      %v370 = vmul.f32 %v364, %v369
      %v371 = vmul.f32 %v365, %v369
      %v373 = vlaneseq
      %v374 = vshrl.u32 %v373, 7
      %v375 = vsub.s32 0, %v374
      %v376 = vrot.slane %v361, %v375
      %v378 = vadd.f32 %v370, %v376
      %v379 = vadd.f32 %v371, %v376
      %v380 = vadd.f32 %v351, %v378
      %v381 = vadd.f32 %v352, %v379
      %v382 = vmax.f32 %v380, 0.0
      %v383 = vmax.f32 %v381, 0.0
      %384 = vst [vmem:[%s325] sm:$0xff] %v382
      %385 = vst [vmem:[%s325 + $0x8] sm:$0xff] %v383
      %p386 = scmp.lt.s32.totalorder %s19, 1
      %s387 = scalar_select %p386, %s19, 1
      %s388 = smul.addr %s387, 2
      %s389 = smul.addr %s388, 8
      %s390 = scalar_lea.vmem %s8, %s389
      // Predicated region
      $region53: #{residual_block.5} parent=51 // pred_check
        %p391 = pneg %p215
      $region54: #{residual_block.5} parent=51 // pred_check_branch
        %393 = sbr.rel (%p391) target = $region56
      $region55: #{residual_block.5} parent=51 // pred_region
        _
      $region56: #{residual_block.5} parent=51 // pred_fallthru
        _
    $region52: #{residual_block.5} parent=5 // pred_fallthru
      _
    %p394 = scmp.le.s32.totalorder 2, %s14
    // Predicated region
    $region57: #{residual_block.5} parent=5 // pred_check
      %p395 = pneg %p394
    $region58: #{residual_block.5} parent=5 // pred_check_branch
      %397 = sbr.rel (%p395) target = $region60
    $region59: #{residual_block.5} parent=5 // pred_region
      %s398 = ssub.s32 %s14, 2
      // Predicated region
      $region61: #{residual_block.5} parent=59 // pred_check
        %p399 = pneg %p221
      $region62: #{residual_block.5} parent=59 // pred_check_branch
        %401 = sbr.rel (%p399) target = $region64
      $region63: #{residual_block.5} parent=59 // pred_region
        %p402 = scmp.lt.s32.totalorder %s20, 1
        %s403 = scalar_select %p402, %s20, 1
        %s404 = smul.addr %s403, 2
        %s405 = smul.addr %s404, 8
        %s406 = scalar_lea.vmem %s8, %s405
      $region64: #{residual_block.5} parent=59 // pred_fallthru
        _
    $region60: #{residual_block.5} parent=5 // pred_fallthru
      _
  $region6: #{residual_block.5} parent=0 // loop_footer
    %s18 = sadd.s32 1, %s14
  $region7: #{residual_block.5} parent=0 // loop_footer_branch
    %13 = sbr.rel target = $region3
  $region8: #{residual_block.5} parent=0 // loop_exit
    _

// kernel: residual_block.4
$region0: #{residual_block.4}
  #allocation0 [shape = 'u32[]', space=smem, size = 0x4, offset = 0x4, fixed_abs, tag = 'smem constant byte address 0x4 - core index']
  #allocation1 [shape = 'u32[144,128]{1,0:T(1,128)}', space=vmem, size = 0x12000, scoped, tag = 'internal scratch']
  %s0 = inlined_call_operand.vmem [shape: bf16[2,16,128], index: 0, kind: input, shape index: {}]
  %s1 = inlined_call_operand.vmem [shape: f32[2,128], index: 1, kind: input, shape index: {}]
  %s2 = inlined_call_operand.vmem [shape: f32[1,128], index: 2, kind: input, shape index: {}]
  %s3 = inlined_call_operand.vmem [shape: f32[1,128], index: 3, kind: input, shape index: {}]
  %s4 = inlined_call_operand.vmem [shape: bf16[3,128,128], index: 4, kind: input, shape index: {}]
  %s5 = inlined_call_operand.vmem [shape: bf16[2,16,128], index: 5, kind: output, shape index: {0}]
  %s6 = inlined_call_operand.vmem [shape: f32[2,128], index: 6, kind: output, shape index: {1}]
  %7 = xla_tuple %s5, %s6
  %s8 = sld [smem:[#allocation0]]
  $region73: #{residual_block.4} parent=0
    _
  %s10 = ssub.s32 1, %s8
  %s11 = scalar_select 0, %s10, %s8
  loop: start=0, step=1, limit=4
  $region2: #{residual_block.4} parent=0 // loop_pre_header
    _
  $region3: #{residual_block.4} parent=0 // loop_header
    %s13 = sphi 0, %s17
    %p14 = scmp.ge.s32.totalorder %s13, 4
    %s23 = sphi 0, %s25
    %s26 = sphi 0, %s23
    %s27 = sphi 0, %s26
    %s43 = sphi 0, %s27
    %s47 = sphi 0, %s47
    %s49 = sphi 0, %s47
    %s50 = sphi 0, %s49
    %s64 = sphi 0, %s50
    %s68 = sphi 0, %s68
    %s70 = sphi 0, %s68
    %s71 = sphi 0, %s70
    %s85 = sphi 0, %s71
    %s89 = sphi 0, %s89
    %s91 = sphi 0, %s89
    %s92 = sphi 0, %s91
    %s106 = sphi 0, %s92
    %s110 = sphi 0, %s110
    %s112 = sphi 0, %s110
    %s113 = sphi 0, %s112
    %s127 = sphi 0, %s113
    %s133 = sphi 0, %s135
    %s136 = sphi 0, %s133
    %s137 = sphi 0, %s136
    %s153 = sphi 0, %s137
    %s157 = sphi 0, %s157
    %s159 = sphi 0, %s157
    %s160 = sphi 0, %s159
    %s174 = sphi 0, %s160
  $region4: #{residual_block.4} parent=0 // loop_header_branch
    %16 = sbr.rel (%p14) target = $region8
  $region5: #{residual_block.4} parent=0 // loop_body
    %s18 = ssub.s32 %s13, 1
    %s19 = ssub.s32 %s13, 2
    %s20 = sadd.s32 %s13, 1
    %s21 = ssub.s32 %s13, %s20
    %p22 = scmp.eq.s32.totalorder %s21, 0
    %s24 = sadd.s32 %s23, 1
    %s25 = scalar_select %p22, %s23, %s24
    %p28 = pneg %p22
    %p29 = scmp.eq.s32.totalorder %s13, 1
    %p30 = por %p28, %p29
    %p31 = scmp.ne.s32.totalorder %s23, %s26
    %p32 = scmp.eq.s32.totalorder %s13, 0
    %p33 = por %p31, %p32
    %p34 = scmp.ne.s32.totalorder %s23, %s26
    %p35 = scmp.eq.s32.totalorder %s18, 1
    %p36 = por %p34, %p35
    %p37 = scmp.ne.s32.totalorder %s26, %s27
    %p38 = scmp.eq.s32.totalorder %s18, 0
    %p39 = por %p37, %p38
    %p40 = scmp.ne.s32.totalorder %s26, %s27
    %p41 = scmp.eq.s32.totalorder %s19, 1
    %p42 = por %p40, %p41
    %p44 = scmp.ne.s32.totalorder %s27, %s43
    %p45 = scmp.eq.s32.totalorder %s19, 0
    %p46 = por %p44, %p45
    %s48 = sadd.s32 %s47, 1
    %p51 = scmp.eq.s32.totalorder %s13, 1
    %p52 = scmp.ne.s32.totalorder %s47, %s49
    %p53 = scmp.eq.s32.totalorder %s13, 0
    %p54 = por %p52, %p53
    %p55 = scmp.ne.s32.totalorder %s47, %s49
    %p56 = scmp.eq.s32.totalorder %s18, 1
    %p57 = por %p55, %p56
    %p58 = scmp.ne.s32.totalorder %s49, %s50
    %p59 = scmp.eq.s32.totalorder %s18, 0
    %p60 = por %p58, %p59
    %p61 = scmp.ne.s32.totalorder %s49, %s50
    %p62 = scmp.eq.s32.totalorder %s19, 1
    %p63 = por %p61, %p62
    %p65 = scmp.ne.s32.totalorder %s50, %s64
    %p66 = scmp.eq.s32.totalorder %s19, 0
    %p67 = por %p65, %p66
    %s69 = sadd.s32 %s68, 1
    %p72 = scmp.eq.s32.totalorder %s13, 1
    %p73 = scmp.ne.s32.totalorder %s68, %s70
    %p74 = scmp.eq.s32.totalorder %s13, 0
    %p75 = por %p73, %p74
    %p76 = scmp.ne.s32.totalorder %s68, %s70
    %p77 = scmp.eq.s32.totalorder %s18, 1
    %p78 = por %p76, %p77
    %p79 = scmp.ne.s32.totalorder %s70, %s71
    %p80 = scmp.eq.s32.totalorder %s18, 0
    %p81 = por %p79, %p80
    %p82 = scmp.ne.s32.totalorder %s70, %s71
    %p83 = scmp.eq.s32.totalorder %s19, 1
    %p84 = por %p82, %p83
    %p86 = scmp.ne.s32.totalorder %s71, %s85
    %p87 = scmp.eq.s32.totalorder %s19, 0
    %p88 = por %p86, %p87
    %s90 = sadd.s32 %s89, 1
    %p93 = scmp.eq.s32.totalorder %s13, 1
    %p94 = scmp.ne.s32.totalorder %s89, %s91
    %p95 = scmp.eq.s32.totalorder %s13, 0
    %p96 = por %p94, %p95
    %p97 = scmp.ne.s32.totalorder %s89, %s91
    %p98 = scmp.eq.s32.totalorder %s18, 1
    %p99 = por %p97, %p98
    %p100 = scmp.ne.s32.totalorder %s91, %s92
    %p101 = scmp.eq.s32.totalorder %s18, 0
    %p102 = por %p100, %p101
    %p103 = scmp.ne.s32.totalorder %s91, %s92
    %p104 = scmp.eq.s32.totalorder %s19, 1
    %p105 = por %p103, %p104
    %p107 = scmp.ne.s32.totalorder %s92, %s106
    %p108 = scmp.eq.s32.totalorder %s19, 0
    %p109 = por %p107, %p108
    %s111 = sadd.s32 %s110, 1
    %p114 = scmp.eq.s32.totalorder %s13, 1
    %p115 = scmp.ne.s32.totalorder %s110, %s112
    %p116 = scmp.eq.s32.totalorder %s13, 0
    %p117 = por %p115, %p116
    %p118 = scmp.ne.s32.totalorder %s110, %s112
    %p119 = scmp.eq.s32.totalorder %s18, 1
    %p120 = por %p118, %p119
    %p121 = scmp.ne.s32.totalorder %s112, %s113
    %p122 = scmp.eq.s32.totalorder %s18, 0
    %p123 = por %p121, %p122
    %p124 = scmp.ne.s32.totalorder %s112, %s113
    %p125 = scmp.eq.s32.totalorder %s19, 1
    %p126 = por %p124, %p125
    %p128 = scmp.ne.s32.totalorder %s113, %s127
    %p129 = scmp.eq.s32.totalorder %s19, 0
    %p130 = por %p128, %p129
    %s131 = ssub.s32 %s13, %s20
    %p132 = scmp.eq.s32.totalorder %s131, 0
    %s134 = sadd.s32 %s133, 1
    %s135 = scalar_select %p132, %s133, %s134
    %p138 = pneg %p132
    %p139 = scmp.eq.s32.totalorder %s13, 1
    %p140 = por %p138, %p139
    %p141 = scmp.ne.s32.totalorder %s133, %s136
    %p142 = scmp.eq.s32.totalorder %s13, 0
    %p143 = por %p141, %p142
    %p144 = scmp.ne.s32.totalorder %s133, %s136
    %p145 = scmp.eq.s32.totalorder %s18, 1
    %p146 = por %p144, %p145
    %p147 = scmp.ne.s32.totalorder %s136, %s137
    %p148 = scmp.eq.s32.totalorder %s18, 0
    %p149 = por %p147, %p148
    %p150 = scmp.ne.s32.totalorder %s136, %s137
    %p151 = scmp.eq.s32.totalorder %s19, 1
    %p152 = por %p150, %p151
    %p154 = scmp.ne.s32.totalorder %s137, %s153
    %p155 = scmp.eq.s32.totalorder %s19, 0
    %p156 = por %p154, %p155
    %s158 = sadd.s32 %s157, 1
    %p161 = scmp.eq.s32.totalorder %s13, 1
    %p162 = scmp.ne.s32.totalorder %s157, %s159
    %p163 = scmp.eq.s32.totalorder %s13, 0
    %p164 = por %p162, %p163
    %p165 = scmp.ne.s32.totalorder %s157, %s159
    %p166 = scmp.eq.s32.totalorder %s18, 1
    %p167 = por %p165, %p166
    %p168 = scmp.ne.s32.totalorder %s159, %s160
    %p169 = scmp.eq.s32.totalorder %s18, 0
    %p170 = por %p168, %p169
    %p171 = scmp.ne.s32.totalorder %s159, %s160
    %p172 = scmp.eq.s32.totalorder %s19, 1
    %p173 = por %p171, %p172
    %p175 = scmp.ne.s32.totalorder %s160, %s174
    %p176 = scmp.eq.s32.totalorder %s19, 0
    %p177 = por %p175, %p176
    %p178 = scmp.le.s32.totalorder 1, %s13
    %p179 = scmp.lt.s32.totalorder %s13, 3
    %p180 = pnand %p178, %p179
    %p181 = pneg %p180
    // Predicated region
    $region9: #{residual_block.4} parent=5 // pred_check
      _
    $region10: #{residual_block.4} parent=5 // pred_check_branch
      %183 = sbr.rel (%p180) target = $region12
    $region11: #{residual_block.4} parent=5 // pred_region
      %s184 = ssub.s32 %s13, 1
      // Predicated region
      $region13: #{residual_block.4} parent=11 // pred_check
        %p185 = pneg %p60
      $region14: #{residual_block.4} parent=11 // pred_check_branch
        %187 = sbr.rel (%p185) target = $region16
      $region15: #{residual_block.4} parent=11 // pred_region
        _
      $region16: #{residual_block.4} parent=11 // pred_fallthru
        _
      // Predicated region
      $region17: #{residual_block.4} parent=11 // pred_check
        %p188 = pneg %p81
      $region18: #{residual_block.4} parent=11 // pred_check_branch
        %190 = sbr.rel (%p188) target = $region20
      $region19: #{residual_block.4} parent=11 // pred_region
        _
      $region20: #{residual_block.4} parent=11 // pred_fallthru
        _
      // Predicated region
      $region21: #{residual_block.4} parent=11 // pred_check
        %p191 = pneg %p102
      $region22: #{residual_block.4} parent=11 // pred_check_branch
        %193 = sbr.rel (%p191) target = $region24
      $region23: #{residual_block.4} parent=11 // pred_region
        _
      $region24: #{residual_block.4} parent=11 // pred_fallthru
        _
      // Predicated region
      $region25: #{residual_block.4} parent=11 // pred_check
        %p194 = pneg %p123
      $region26: #{residual_block.4} parent=11 // pred_check_branch
        %196 = sbr.rel (%p194) target = $region28
      $region27: #{residual_block.4} parent=11 // pred_region
        _
      $region28: #{residual_block.4} parent=11 // pred_fallthru
        _
    $region12: #{residual_block.4} parent=5 // pred_fallthru
      _
    %p197 = scmp.lt.s32.totalorder %s13, 2
    // Predicated region
    $region29: #{residual_block.4} parent=5 // pred_check
      %p198 = pneg %p197
    $region30: #{residual_block.4} parent=5 // pred_check_branch
      %200 = sbr.rel (%p198) target = $region32
    $region31: #{residual_block.4} parent=5 // pred_region
      // Predicated region
      $region33: #{residual_block.4} parent=31 // pred_check
        %p201 = pneg %p33
      $region34: #{residual_block.4} parent=31 // pred_check_branch
        %203 = sbr.rel (%p201) target = $region36
      $region35: #{residual_block.4} parent=31 // pred_region
        %p204 = scmp.lt.s32.totalorder %s13, 1
        %s205 = scalar_select %p204, %s13, 1
        %s206 = smul.addr %s205, 2
        %s207 = smul.addr %s206, 4
        %s208 = scalar_lea.vmem %s0, %s207
      $region36: #{residual_block.4} parent=31 // pred_fallthru
        _
    $region32: #{residual_block.4} parent=5 // pred_fallthru
      _
    %p209 = scmp.le.s32.totalorder 1, %s13
    %p210 = scmp.lt.s32.totalorder %s13, 3
    %p211 = pnand %p209, %p210
    %p212 = pneg %p211
    // Predicated region
    $region37: #{residual_block.4} parent=5 // pred_check
      _
    $region38: #{residual_block.4} parent=5 // pred_check_branch
      %214 = sbr.rel (%p211) target = $region40
    $region39: #{residual_block.4} parent=5 // pred_region
      %s215 = ssub.s32 %s13, 1
      %p216 = scmp.lt.s32.totalorder %s18, 1
      %s217 = scalar_select %p216, %s18, 1
      %s218 = smul.addr %s217, 2
      %s219 = smul.addr %s218, 4
      %s220 = scalar_lea.vmem %s0, %s219
      %p221 = pneg %p39
      %p222 = pneg %p36
      %p223 = pneg %p60
      %p224 = pneg %p57
      %p225 = pneg %p81
      %p226 = pneg %p78
      %p227 = pneg %p102
      %p228 = pneg %p99
      %p229 = pneg %p123
      %p230 = pneg %p120
      %p231 = pneg %p149
      %p232 = pneg %p146
      %p233 = scmp.lt.s32.totalorder %s18, 1
      %s234 = scalar_select %p233, %s18, 1
      %s235 = smul.addr %s234, 2
      %s236 = smul.addr %s235, 4
      %s237 = scalar_lea.vmem %s5, %s236
      %p238 = pneg %p170
      %p239 = pneg %p167
      %p240 = scmp.lt.s32.totalorder %s18, 1
      %s241 = scalar_select %p240, %s18, 1
      %s242 = smul.addr %s241, 2
      %s243 = smul.addr %s242, 4
      %s244 = scalar_lea.vmem %s0, %s243
      %p245 = scmp.lt.s32.totalorder %s18, 1
      %s246 = scalar_select %p245, %s18, 1
      %s247 = smul.addr %s246, 2
      %s248 = smul.addr %s247, 4
      %s249 = scalar_lea.vmem %s5, %s248
      %v251 = vld [vmem:[%s1] sm:$0x1]
      %v252 = vld [vmem:[%s1 + $0x1] sm:$0x1]
      %v253 = vadd.f32 %v252, 1e-05
      %v254 = vrsqrt.pop %v253
      %v255 = vld [vmem:[%s2] sm:$0x1]
      %v256 = vmul.f32 %v254, %v255
      %v257 = vld [vmem:[%s3] sm:$0x1]
      %v258 = vmul.f32 %v251, %v256
      %v259 = vsub.f32 %v257, %v258
      %v260 = vld [vmem:[%s244] sm:$0xf]
      %v261 = vld [vmem:[%s244 + $0x4] sm:$0xf]
      %v262 = vunpack.c.l.bf16 %v260
      %v263 = vunpack.c.l.bf16 %v261
      %v264 = vlaneseq
      %v265 = vshrl.u32 %v264, 7
      %v266 = vsub.s32 0, %v265
      %v267 = vrot.slane %v256, %v266
      %v268 = vmul.f32 %v262, %v267
      %v269 = vmul.f32 %v263, %v267
      %v271 = vlaneseq
      %v272 = vshrl.u32 %v271, 7
      %v273 = vsub.s32 0, %v272
      %v274 = vrot.slane %v259, %v273
      %v276 = vadd.f32 %v268, %v274
      %v277 = vadd.f32 %v269, %v274
      %v278 = vmax.f32 %v276, 0.0
      %v279 = vmax.f32 %v277, 0.0
      %v280 = vlaneseq
      %v281 = vshrl.u32 %v280, 7
      %v282 = vadd.s32 %v281, 8
      %v283 = vrot.slane %v278, 7
      %v284 = vrot.slane %v279, 7
      %vm285 = vcmp.lt.s32.totalorder %v281, 1
      %v286 = vsel %vm285, %v283, %v284
      %v287 = vsel %vm285, %v284, %v283
      %v288 = vadd.s32 %v281, 4294967295
      %v289 = vadd.s32 %v282, 4294967295
      %vm290 = vcmp.ge.s32.totalorder %v288, 0
      %vm291 = vcmp.ge.s32.totalorder %v289, 0
      %vm292 = vcmp.lt.s32.totalorder %v288, 16
      %vm293 = vcmp.lt.s32.totalorder %v289, 16
      %vm294 = vmand %vm290, %vm292
      %vm295 = vmand %vm291, %vm293
      %v296 = vsel %vm294, %v287, 0.0
      %v297 = vsel %vm295, %v286, 0.0
      %v298 = vpack.c.bf16 %v297, %v296
      %v299 = vld [vmem:[%s4] sm:$0xf]
      %v300 = vld [vmem:[%s4 + $0x4] sm:$0xf]
      %v301 = vld [vmem:[%s4 + $0x8] sm:$0xf]
      %v302 = vld [vmem:[%s4 + $0xc] sm:$0xf]
      %v303 = vld [vmem:[%s4 + $0x10] sm:$0xf]
      %v304 = vld [vmem:[%s4 + $0x14] sm:$0xf]
      %v305 = vld [vmem:[%s4 + $0x18] sm:$0xf]
      %v306 = vld [vmem:[%s4 + $0x1c] sm:$0xf]
      %v307 = vld [vmem:[%s4 + $0x20] sm:$0xf]
      %v308 = vld [vmem:[%s4 + $0x24] sm:$0xf]
      %v309 = vld [vmem:[%s4 + $0x28] sm:$0xf]
      %v310 = vld [vmem:[%s4 + $0x2c] sm:$0xf]
      %v311 = vld [vmem:[%s4 + $0x30] sm:$0xf]
      %v312 = vld [vmem:[%s4 + $0x34] sm:$0xf]
      %v313 = vld [vmem:[%s4 + $0x38] sm:$0xf]
      %v314 = vld [vmem:[%s4 + $0x3c] sm:$0xf]
      %v315 = vpack.c.bf16 %v279, %v278
      %s316 = scalar_lea.vmem %s4, 64
      %v317 = vld [vmem:[%s316] sm:$0xf]
      %v318 = vld [vmem:[%s316 + $0x4] sm:$0xf]
      %v319 = vld [vmem:[%s316 + $0x8] sm:$0xf]
      %v320 = vld [vmem:[%s316 + $0xc] sm:$0xf]
      %v321 = vld [vmem:[%s316 + $0x10] sm:$0xf]
      %v322 = vld [vmem:[%s316 + $0x14] sm:$0xf]
      %v323 = vld [vmem:[%s316 + $0x18] sm:$0xf]
      %v324 = vld [vmem:[%s316 + $0x1c] sm:$0xf]
      %v325 = vld [vmem:[%s316 + $0x20] sm:$0xf]
      %v326 = vld [vmem:[%s316 + $0x24] sm:$0xf]
      %v327 = vld [vmem:[%s316 + $0x28] sm:$0xf]
      %v328 = vld [vmem:[%s316 + $0x2c] sm:$0xf]
      %v329 = vld [vmem:[%s316 + $0x30] sm:$0xf]
      %v330 = vld [vmem:[%s316 + $0x34] sm:$0xf]
      %v331 = vld [vmem:[%s316 + $0x38] sm:$0xf]
      %v332 = vld [vmem:[%s316 + $0x3c] sm:$0xf]
      %v349 = vunpack.c.l.b16 %v317
      %v350 = vunpack.c.l.b16 %v318
      %v351 = vunpack.c.l.b16 %v319
      %v352 = vunpack.c.l.b16 %v320
      %v353 = vunpack.c.l.b16 %v321
      %v354 = vunpack.c.l.b16 %v322
      %v355 = vunpack.c.l.b16 %v323
      %v356 = vunpack.c.l.b16 %v324
      %v357 = vunpack.c.l.b16 %v325
      %v358 = vunpack.c.l.b16 %v326
      %v359 = vunpack.c.l.b16 %v327
      %v360 = vunpack.c.l.b16 %v328
      %v361 = vunpack.c.l.b16 %v329
      %v362 = vunpack.c.l.b16 %v330
      %v363 = vunpack.c.l.b16 %v331
      %v364 = vunpack.c.l.b16 %v332
      %v365 = vpack.c.b16 %v350, %v349
      %v366 = vpack.c.b16 %v352, %v351
      %v367 = vpack.c.b16 %v354, %v353
      %v368 = vpack.c.b16 %v356, %v355
      %v369 = vpack.c.b16 %v358, %v357
      %v370 = vpack.c.b16 %v360, %v359
      %v371 = vpack.c.b16 %v362, %v361
      %v372 = vpack.c.b16 %v364, %v363
      %381 = vmatprep.subr.bf16.mxu0 0
      %382 = vmatpush1.bf16.msra.mxu0 %v365
      %383 = vmatprep.subr.bf16.mxu0 0
      %384 = vmatpush1.bf16.msra.mxu0 %v366
      %385 = vmatprep.subr.bf16.mxu0 0
      %386 = vmatpush1.bf16.msra.mxu0 %v367
      %387 = vmatprep.subr.bf16.mxu0 0
      %388 = vmatpush1.bf16.msra.mxu0 %v368
      %389 = vmatprep.subr.bf16.mxu0 0
      %390 = vmatpush1.bf16.msra.mxu0 %v369
      %391 = vmatprep.subr.bf16.mxu0 0
      %392 = vmatpush1.bf16.msra.mxu0 %v370
      %393 = vmatprep.subr.bf16.mxu0 0
      %394 = vmatpush1.bf16.msra.mxu0 %v371
      %395 = vmatprep.subr.bf16.mxu0 0
      %396 = vmatpush1.bf16.msra.mxu0 %v372
      %397 = vmatprep.subr.bf16.mxu0 0
      %398 = vmatpush1.bf16.msra.mxu0 0
      %399 = vmatprep.subr.bf16.mxu0 0
      %400 = vmatpush1.bf16.msra.mxu0 0
      %401 = vmatprep.subr.bf16.mxu0 0
      %402 = vmatpush1.bf16.msra.mxu0 0
      %403 = vmatprep.subr.bf16.mxu0 0
      %404 = vmatpush1.bf16.msra.mxu0 0
      %405 = vmatprep.subr.bf16.mxu0 0
      %406 = vmatpush1.bf16.msra.mxu0 0
      %407 = vmatprep.subr.bf16.mxu0 0
      %408 = vmatpush1.bf16.msra.mxu0 0
      %409 = vmatprep.subr.bf16.mxu0 0
      %410 = vmatpush1.bf16.msra.mxu0 0
      %411 = vmatprep.subr.bf16.mxu0 0
      %412 = vmatpush1.bf16.msra.mxu0 0
      %413 = vmatprep.mubr.bf16.mxu0 0
      %414 = vmatmul.mubr.bf16.gmra.mrb[0].mxu0 %v315
      %v415 = vpop.f32.mrb[0].mxu0
      %v416 = vadd.f32 0.0, %v415
      %v417 = vpop.f32.mrb[0].mxu0
      %v418 = vpop.f32.mrb[0].mxu0
      %v419 = vadd.f32 0.0, %v418
      %v420 = vpop.f32.mrb[0].mxu0
      %421 = vdwg.mxu0
      %v438 = vunpack.c.l.b16 %v299
      %v439 = vunpack.c.l.b16 %v300
      %v440 = vunpack.c.l.b16 %v301
      %v441 = vunpack.c.l.b16 %v302
      %v442 = vunpack.c.l.b16 %v303
      %v443 = vunpack.c.l.b16 %v304
      %v444 = vunpack.c.l.b16 %v305
      %v445 = vunpack.c.l.b16 %v306
      %v446 = vunpack.c.l.b16 %v307
      %v447 = vunpack.c.l.b16 %v308
      %v448 = vunpack.c.l.b16 %v309
      %v449 = vunpack.c.l.b16 %v310
      %v450 = vunpack.c.l.b16 %v311
      %v451 = vunpack.c.l.b16 %v312
      %v452 = vunpack.c.l.b16 %v313
      %v453 = vunpack.c.l.b16 %v314
      %v454 = vpack.c.b16 %v439, %v438
      %v455 = vpack.c.b16 %v441, %v440
      %v456 = vpack.c.b16 %v443, %v442
      %v457 = vpack.c.b16 %v445, %v444
      %v458 = vpack.c.b16 %v447, %v446
      %v459 = vpack.c.b16 %v449, %v448
      %v460 = vpack.c.b16 %v451, %v450
      %v461 = vpack.c.b16 %v453, %v452
      %470 = vmatprep.subr.bf16.mxu0 0
      %471 = vmatpush1.bf16.msra.mxu0 %v454
      %472 = vmatprep.subr.bf16.mxu0 0
      %473 = vmatpush1.bf16.msra.mxu0 %v455
      %474 = vmatprep.subr.bf16.mxu0 0
      %475 = vmatpush1.bf16.msra.mxu0 %v456
      %476 = vmatprep.subr.bf16.mxu0 0
      %477 = vmatpush1.bf16.msra.mxu0 %v457
      %478 = vmatprep.subr.bf16.mxu0 0
      %479 = vmatpush1.bf16.msra.mxu0 %v458
      %480 = vmatprep.subr.bf16.mxu0 0
      %481 = vmatpush1.bf16.msra.mxu0 %v459
      %482 = vmatprep.subr.bf16.mxu0 0
      %483 = vmatpush1.bf16.msra.mxu0 %v460
      %484 = vmatprep.subr.bf16.mxu0 0
      %485 = vmatpush1.bf16.msra.mxu0 %v461
      %486 = vmatprep.subr.bf16.mxu0 0
      %487 = vmatpush1.bf16.msra.mxu0 0
      %488 = vmatprep.subr.bf16.mxu0 0
      %489 = vmatpush1.bf16.msra.mxu0 0
      %490 = vmatprep.subr.bf16.mxu0 0
      %491 = vmatpush1.bf16.msra.mxu0 0
      %492 = vmatprep.subr.bf16.mxu0 0
      %493 = vmatpush1.bf16.msra.mxu0 0
      %494 = vmatprep.subr.bf16.mxu0 0
      %495 = vmatpush1.bf16.msra.mxu0 0
      %496 = vmatprep.subr.bf16.mxu0 0
      %497 = vmatpush1.bf16.msra.mxu0 0
      %498 = vmatprep.subr.bf16.mxu0 0
      %499 = vmatpush1.bf16.msra.mxu0 0
      %500 = vmatprep.subr.bf16.mxu0 0
      %501 = vmatpush1.bf16.msra.mxu0 0
      %502 = vmatprep.mubr.bf16.mxu0 0
      %503 = vmatmul.mubr.bf16.gmra.mrb[0].mxu0 %v298
      %v504 = vpop.f32.mrb[0].mxu0
      %v505 = vadd.f32 %v416, %v504
      %v506 = vpop.f32.mrb[0].mxu0
      %v507 = vpop.f32.mrb[0].mxu0
      %v508 = vadd.f32 %v419, %v507
      %v509 = vpop.f32.mrb[0].mxu0
      %510 = vdwg.mxu0
      %v511 = vrot.slane %v278, 1
      %v512 = vrot.slane %v279, 1
      %vm513 = vcmp.lt.s32.totalorder %v281, 7
      %v514 = vsel %vm513, %v511, %v512
      %v515 = vsel %vm513, %v512, %v511
      %v516 = vadd.s32 %v281, 1
      %v517 = vadd.s32 %v282, 1
      %vm518 = vcmp.ge.s32.totalorder %v516, 0
      %vm519 = vcmp.ge.s32.totalorder %v517, 0
      %vm520 = vcmp.lt.s32.totalorder %v516, 16
      %vm521 = vcmp.lt.s32.totalorder %v517, 16
      %vm522 = vmand %vm518, %vm520
      %vm523 = vmand %vm519, %vm521
      %v524 = vsel %vm522, %v514, 0.0
      %v525 = vsel %vm523, %v515, 0.0
      %v526 = vpack.c.bf16 %v525, %v524
      %s527 = scalar_lea.vmem %s4, 128
      %v528 = vld [vmem:[%s527] sm:$0xf]
      %v529 = vld [vmem:[%s527 + $0x4] sm:$0xf]
      %v530 = vld [vmem:[%s527 + $0x8] sm:$0xf]
      %v531 = vld [vmem:[%s527 + $0xc] sm:$0xf]
      %v532 = vld [vmem:[%s527 + $0x10] sm:$0xf]
      %v533 = vld [vmem:[%s527 + $0x14] sm:$0xf]
      %v534 = vld [vmem:[%s527 + $0x18] sm:$0xf]
      %v535 = vld [vmem:[%s527 + $0x1c] sm:$0xf]
      %v536 = vld [vmem:[%s527 + $0x20] sm:$0xf]
      %v537 = vld [vmem:[%s527 + $0x24] sm:$0xf]
      %v538 = vld [vmem:[%s527 + $0x28] sm:$0xf]
      %v539 = vld [vmem:[%s527 + $0x2c] sm:$0xf]
      %v540 = vld [vmem:[%s527 + $0x30] sm:$0xf]
      %v541 = vld [vmem:[%s527 + $0x34] sm:$0xf]
      %v542 = vld [vmem:[%s527 + $0x38] sm:$0xf]
      %v543 = vld [vmem:[%s527 + $0x3c] sm:$0xf]
      %v560 = vunpack.c.l.b16 %v528
      %v561 = vunpack.c.l.b16 %v529
      %v562 = vunpack.c.l.b16 %v530
      %v563 = vunpack.c.l.b16 %v531
      %v564 = vunpack.c.l.b16 %v532
      %v565 = vunpack.c.l.b16 %v533
      %v566 = vunpack.c.l.b16 %v534
      %v567 = vunpack.c.l.b16 %v535
      %v568 = vunpack.c.l.b16 %v536
      %v569 = vunpack.c.l.b16 %v537
      %v570 = vunpack.c.l.b16 %v538
      %v571 = vunpack.c.l.b16 %v539
      %v572 = vunpack.c.l.b16 %v540
      %v573 = vunpack.c.l.b16 %v541
      %v574 = vunpack.c.l.b16 %v542
      %v575 = vunpack.c.l.b16 %v543
      %v576 = vpack.c.b16 %v561, %v560
      %v577 = vpack.c.b16 %v563, %v562
      %v578 = vpack.c.b16 %v565, %v564
      %v579 = vpack.c.b16 %v567, %v566
      %v580 = vpack.c.b16 %v569, %v568
      %v581 = vpack.c.b16 %v571, %v570
      %v582 = vpack.c.b16 %v573, %v572
      %v583 = vpack.c.b16 %v575, %v574
      %592 = vmatprep.subr.bf16.mxu0 0
      %593 = vmatpush1.bf16.msra.mxu0 %v576
      %594 = vmatprep.subr.bf16.mxu0 0
      %595 = vmatpush1.bf16.msra.mxu0 %v577
      %596 = vmatprep.subr.bf16.mxu0 0
      %597 = vmatpush1.bf16.msra.mxu0 %v578
      %598 = vmatprep.subr.bf16.mxu0 0
      %599 = vmatpush1.bf16.msra.mxu0 %v579
      %600 = vmatprep.subr.bf16.mxu0 0
      %601 = vmatpush1.bf16.msra.mxu0 %v580
      %602 = vmatprep.subr.bf16.mxu0 0
      %603 = vmatpush1.bf16.msra.mxu0 %v581
      %604 = vmatprep.subr.bf16.mxu0 0
      %605 = vmatpush1.bf16.msra.mxu0 %v582
      %606 = vmatprep.subr.bf16.mxu0 0
      %607 = vmatpush1.bf16.msra.mxu0 %v583
      %608 = vmatprep.subr.bf16.mxu0 0
      %609 = vmatpush1.bf16.msra.mxu0 0
      %610 = vmatprep.subr.bf16.mxu0 0
      %611 = vmatpush1.bf16.msra.mxu0 0
      %612 = vmatprep.subr.bf16.mxu0 0
      %613 = vmatpush1.bf16.msra.mxu0 0
      %614 = vmatprep.subr.bf16.mxu0 0
      %615 = vmatpush1.bf16.msra.mxu0 0
      %616 = vmatprep.subr.bf16.mxu0 0
      %617 = vmatpush1.bf16.msra.mxu0 0
      %618 = vmatprep.subr.bf16.mxu0 0
      %619 = vmatpush1.bf16.msra.mxu0 0
      %620 = vmatprep.subr.bf16.mxu0 0
      %621 = vmatpush1.bf16.msra.mxu0 0
      %622 = vmatprep.subr.bf16.mxu0 0
      %623 = vmatpush1.bf16.msra.mxu0 0
      %624 = vmatprep.mubr.bf16.mxu0 0
      %625 = vmatmul.mubr.bf16.gmra.mrb[0].mxu0 %v526
      %v626 = vpop.f32.mrb[0].mxu0
      %v627 = vadd.f32 0.0, %v626
      %v628 = vpop.f32.mrb[0].mxu0
      %v629 = vpop.f32.mrb[0].mxu0
      %v630 = vadd.f32 0.0, %v629
      %v631 = vpop.f32.mrb[0].mxu0
      %632 = vdwg.mxu0
      %v633 = vadd.f32 %v505, %v627
      %v634 = vadd.f32 %v508, %v630
      %v635 = vpack.c.bf16 %v634, %v633
      %v637 = vunpack.c.l.b16 %v635
      %v638 = vunpack.c.h.b16 %v635
      %v639 = vpack.c.b16 %v637, %v637
      %v640 = vpack.c.b16 %v638, %v638
      %643 = vst [vmem:[%s249] sm:$0xf] %v639
      %644 = vst [vmem:[%s249 + $0x4] sm:$0xf] %v640
      %v645 = vadd.f32 %v633, %v634
      %v646 = vrot.slane %v645, 4
      %v647 = vadd.f32 %v645, %v646
      %v648 = vrot.slane %v647, 2
      %v649 = vadd.f32 %v647, %v648
      %v650 = vrot.slane %v649, 1
      %v651 = vadd.f32 %v649, %v650
      %v652 = vmul.f32 %v651, 0.0625
      %v653 = vsub.f32 %v633, %v652
      %v654 = vsub.f32 %v634, %v652
      %v655 = vmul.f32 %v653, %v653
      %v656 = vmul.f32 %v654, %v654
      %v657 = vadd.f32 %v655, %v656
      %v658 = vrot.slane %v657, 4
      %v659 = vadd.f32 %v657, %v658
      %v660 = vrot.slane %v659, 2
      %v661 = vadd.f32 %v659, %v660
      %v662 = vrot.slane %v661, 1
      %v663 = vadd.f32 %v661, %v662
      %p664 = scmp.eq.s32.totalorder %s18, 0
      // Predicated region
      $region41: #{residual_block.4} parent=39 // pred_check
        %p665 = pneg %p664
      $region42: #{residual_block.4} parent=39 // pred_check_branch
        %667 = sbr.rel (%p665) target = $region44
      $region43: #{residual_block.4} parent=39 // pred_region
        %668 = vst [vmem:[%s6] sm:$0x1] %v652
        %669 = vst [vmem:[%s6 + $0x1] sm:$0x1] %v663
      $region44: #{residual_block.4} parent=39 // pred_fallthru
        _
      %p670 = scmp.gt.s32.totalorder %s18, 0
      // Predicated region
      $region45: #{residual_block.4} parent=39 // pred_check
        %p671 = pneg %p670
      $region46: #{residual_block.4} parent=39 // pred_check_branch
        %673 = sbr.rel (%p671) target = $region48
      $region47: #{residual_block.4} parent=39 // pred_region
        %s674 = smul.u32 %s18, 16
        %s675 = scvt.s32.f32 %s674
        %s676 = sadd.f32 %s675, 16.0
        %v677 = vstv %s676
        %v678 = vrcp.pop %v677
        %s679 = vtos %v678
        %s680 = smul.f32 16.0, %s679
        %v681 = vld [vmem:[%s6] sm:$0x1]
        %v682 = vsub.f32 %v652, %v681
        %v683 = vstv %s680
        %v684 = vmul.f32 %v682, %v683
        %v685 = vadd.f32 %v681, %v684
        %686 = vst [vmem:[%s6] sm:$0x1] %v685
        %v687 = vld [vmem:[%s6 + $0x1] sm:$0x1]
        %v688 = vadd.f32 %v687, %v663
        %v689 = vmul.f32 %v682, %v682
        %s690 = smul.f32 %s675, %s680
        %v691 = vstv %s690
        %v692 = vmul.f32 %v689, %v691
        %v693 = vadd.f32 %v688, %v692
        %694 = vst [vmem:[%s6 + $0x1] sm:$0x1] %v693
      $region48: #{residual_block.4} parent=39 // pred_fallthru
        _
      %p695 = scmp.eq.s32.totalorder %s18, 1
      // Predicated region
      $region49: #{residual_block.4} parent=39 // pred_check
        %p696 = pneg %p695
      $region50: #{residual_block.4} parent=39 // pred_check_branch
        %698 = sbr.rel (%p696) target = $region52
      $region51: #{residual_block.4} parent=39 // pred_region
        %v699 = vld [vmem:[%s6 + $0x1] sm:$0x1]
        %v700 = vmul.f32 %v699, 0.03125
        %v701 = vmax.f32 %v700, 0.0
        %702 = vst [vmem:[%s6 + $0x1] sm:$0x1] %v701
      $region52: #{residual_block.4} parent=39 // pred_fallthru
        _
      %p703 = scmp.lt.s32.totalorder %s18, 1
      %s704 = scalar_select %p703, %s18, 1
      %s705 = smul.addr %s704, 2
      %s706 = smul.addr %s705, 4
      %s707 = scalar_lea.vmem %s5, %s706
      // Predicated region
      $region53: #{residual_block.4} parent=39 // pred_check
        %p708 = pneg %p146
      $region54: #{residual_block.4} parent=39 // pred_check_branch
        %710 = sbr.rel (%p708) target = $region56
      $region55: #{residual_block.4} parent=39 // pred_region
        _
      $region56: #{residual_block.4} parent=39 // pred_fallthru
        _
      // Predicated region
      $region57: #{residual_block.4} parent=39 // pred_check
        %p711 = pneg %p167
      $region58: #{residual_block.4} parent=39 // pred_check_branch
        %713 = sbr.rel (%p711) target = $region60
      $region59: #{residual_block.4} parent=39 // pred_region
        _
      $region60: #{residual_block.4} parent=39 // pred_fallthru
        _
      // Predicated region
      $region61: #{residual_block.4} parent=39 // pred_check
        %p714 = pneg %p167
      $region62: #{residual_block.4} parent=39 // pred_check_branch
        %716 = sbr.rel (%p714) target = $region64
      $region63: #{residual_block.4} parent=39 // pred_region
        _
      $region64: #{residual_block.4} parent=39 // pred_fallthru
        _
    $region40: #{residual_block.4} parent=5 // pred_fallthru
      _
    %p717 = scmp.le.s32.totalorder 2, %s13
    // Predicated region
    $region65: #{residual_block.4} parent=5 // pred_check
      %p718 = pneg %p717
    $region66: #{residual_block.4} parent=5 // pred_check_branch
      %720 = sbr.rel (%p718) target = $region68
    $region67: #{residual_block.4} parent=5 // pred_region
      %s721 = ssub.s32 %s13, 2
      // Predicated region
      $region69: #{residual_block.4} parent=67 // pred_check
        %p722 = pneg %p152
      $region70: #{residual_block.4} parent=67 // pred_check_branch
        %724 = sbr.rel (%p722) target = $region72
      $region71: #{residual_block.4} parent=67 // pred_region
        %p725 = scmp.lt.s32.totalorder %s19, 1
        %s726 = scalar_select %p725, %s19, 1
        %s727 = smul.addr %s726, 2
        %s728 = smul.addr %s727, 4
        %s729 = scalar_lea.vmem %s5, %s728
      $region72: #{residual_block.4} parent=67 // pred_fallthru
        _
    $region68: #{residual_block.4} parent=5 // pred_fallthru
      _
  $region6: #{residual_block.4} parent=0 // loop_footer
    %s17 = sadd.s32 1, %s13
  $region7: #{residual_block.4} parent=0 // loop_footer_branch
    %12 = sbr.rel target = $region3
  $region8: #{residual_block.4} parent=0 // loop_exit
    _

// kernel: residual_block.3
$region0: #{residual_block.3}
  #allocation0 [shape = 'u32[]', space=smem, size = 0x4, offset = 0x4, fixed_abs, tag = 'smem constant byte address 0x4 - core index']
  #allocation1 [shape = 'u32[144,128]{1,0:T(1,128)}', space=vmem, size = 0x12000, scoped, tag = 'internal scratch']
  %s0 = inlined_call_operand.vmem [shape: bf16[2,18,128], index: 0, kind: input, shape index: {}]
  %s1 = inlined_call_operand.vmem [shape: bf16[3,128,128], index: 1, kind: input, shape index: {}]
  %s2 = inlined_call_operand.vmem [shape: bf16[128,128], index: 2, kind: input, shape index: {}]
  %s3 = inlined_call_operand.vmem [shape: bf16[2,16,128], index: 3, kind: output, shape index: {0}]
  %s4 = inlined_call_operand.vmem [shape: f32[2,128], index: 4, kind: output, shape index: {1}]
  %s5 = inlined_call_operand.vmem [shape: bf16[2,16,128], index: 5, kind: output, shape index: {2}]
  %s6 = inlined_call_operand.vmem [shape: f32[2,128], index: 6, kind: output, shape index: {3}]
  %7 = xla_tuple %s3, %s4, %s5, %s6
  %s8 = sld [smem:[#allocation0]]
  $region93: #{residual_block.3} parent=0
    _
  %s10 = ssub.s32 1, %s8
  %s11 = scalar_select 0, %s10, %s8
  loop: start=0, step=1, limit=4
  $region2: #{residual_block.3} parent=0 // loop_pre_header
    _
  $region3: #{residual_block.3} parent=0 // loop_header
    %s13 = sphi 0, %s17
    %p14 = scmp.ge.s32.totalorder %s13, 4
    %s23 = sphi 0, %s25
    %s26 = sphi 0, %s23
    %s27 = sphi 0, %s26
    %s43 = sphi 0, %s27
    %s47 = sphi 0, %s47
    %s49 = sphi 0, %s47
    %s50 = sphi 0, %s49
    %s64 = sphi 0, %s50
    %s68 = sphi 0, %s68
    %s70 = sphi 0, %s68
    %s71 = sphi 0, %s70
    %s85 = sphi 0, %s71
    %s91 = sphi 0, %s93
    %s94 = sphi 0, %s91
    %s95 = sphi 0, %s94
    %s111 = sphi 0, %s95
    %s115 = sphi 0, %s115
    %s117 = sphi 0, %s115
    %s118 = sphi 0, %s117
    %s132 = sphi 0, %s118
    %s138 = sphi 0, %s140
    %s141 = sphi 0, %s138
    %s142 = sphi 0, %s141
    %s158 = sphi 0, %s142
    %s162 = sphi 0, %s162
    %s164 = sphi 0, %s162
    %s165 = sphi 0, %s164
    %s179 = sphi 0, %s165
  $region4: #{residual_block.3} parent=0 // loop_header_branch
    %16 = sbr.rel (%p14) target = $region8
  $region5: #{residual_block.3} parent=0 // loop_body
    %s18 = ssub.s32 %s13, 1
    %s19 = ssub.s32 %s13, 2
    %s20 = sadd.s32 %s13, 1
    %s21 = ssub.s32 %s13, %s20
    %p22 = scmp.eq.s32.totalorder %s21, 0
    %s24 = sadd.s32 %s23, 1
    %s25 = scalar_select %p22, %s23, %s24
    %p28 = pneg %p22
    %p29 = scmp.eq.s32.totalorder %s13, 1
    %p30 = por %p28, %p29
    %p31 = scmp.ne.s32.totalorder %s23, %s26
    %p32 = scmp.eq.s32.totalorder %s13, 0
    %p33 = por %p31, %p32
    %p34 = scmp.ne.s32.totalorder %s23, %s26
    %p35 = scmp.eq.s32.totalorder %s18, 1
    %p36 = por %p34, %p35
    %p37 = scmp.ne.s32.totalorder %s26, %s27
    %p38 = scmp.eq.s32.totalorder %s18, 0
    %p39 = por %p37, %p38
    %p40 = scmp.ne.s32.totalorder %s26, %s27
    %p41 = scmp.eq.s32.totalorder %s19, 1
    %p42 = por %p40, %p41
    %p44 = scmp.ne.s32.totalorder %s27, %s43
    %p45 = scmp.eq.s32.totalorder %s19, 0
    %p46 = por %p44, %p45
    %s48 = sadd.s32 %s47, 1
    %p51 = scmp.eq.s32.totalorder %s13, 1
    %p52 = scmp.ne.s32.totalorder %s47, %s49
    %p53 = scmp.eq.s32.totalorder %s13, 0
    %p54 = por %p52, %p53
    %p55 = scmp.ne.s32.totalorder %s47, %s49
    %p56 = scmp.eq.s32.totalorder %s18, 1
    %p57 = por %p55, %p56
    %p58 = scmp.ne.s32.totalorder %s49, %s50
    %p59 = scmp.eq.s32.totalorder %s18, 0
    %p60 = por %p58, %p59
    %p61 = scmp.ne.s32.totalorder %s49, %s50
    %p62 = scmp.eq.s32.totalorder %s19, 1
    %p63 = por %p61, %p62
    %p65 = scmp.ne.s32.totalorder %s50, %s64
    %p66 = scmp.eq.s32.totalorder %s19, 0
    %p67 = por %p65, %p66
    %s69 = sadd.s32 %s68, 1
    %p72 = scmp.eq.s32.totalorder %s13, 1
    %p73 = scmp.ne.s32.totalorder %s68, %s70
    %p74 = scmp.eq.s32.totalorder %s13, 0
    %p75 = por %p73, %p74
    %p76 = scmp.ne.s32.totalorder %s68, %s70
    %p77 = scmp.eq.s32.totalorder %s18, 1
    %p78 = por %p76, %p77
    %p79 = scmp.ne.s32.totalorder %s70, %s71
    %p80 = scmp.eq.s32.totalorder %s18, 0
    %p81 = por %p79, %p80
    %p82 = scmp.ne.s32.totalorder %s70, %s71
    %p83 = scmp.eq.s32.totalorder %s19, 1
    %p84 = por %p82, %p83
    %p86 = scmp.ne.s32.totalorder %s71, %s85
    %p87 = scmp.eq.s32.totalorder %s19, 0
    %p88 = por %p86, %p87
    %s89 = ssub.s32 %s13, %s20
    %p90 = scmp.eq.s32.totalorder %s89, 0
    %s92 = sadd.s32 %s91, 1
    %s93 = scalar_select %p90, %s91, %s92
    %p96 = pneg %p90
    %p97 = scmp.eq.s32.totalorder %s13, 1
    %p98 = por %p96, %p97
    %p99 = scmp.ne.s32.totalorder %s91, %s94
    %p100 = scmp.eq.s32.totalorder %s13, 0
    %p101 = por %p99, %p100
    %p102 = scmp.ne.s32.totalorder %s91, %s94
    %p103 = scmp.eq.s32.totalorder %s18, 1
    %p104 = por %p102, %p103
    %p105 = scmp.ne.s32.totalorder %s94, %s95
    %p106 = scmp.eq.s32.totalorder %s18, 0
    %p107 = por %p105, %p106
    %p108 = scmp.ne.s32.totalorder %s94, %s95
    %p109 = scmp.eq.s32.totalorder %s19, 1
    %p110 = por %p108, %p109
    %p112 = scmp.ne.s32.totalorder %s95, %s111
    %p113 = scmp.eq.s32.totalorder %s19, 0
    %p114 = por %p112, %p113
    %s116 = sadd.s32 %s115, 1
    %p119 = scmp.eq.s32.totalorder %s13, 1
    %p120 = scmp.ne.s32.totalorder %s115, %s117
    %p121 = scmp.eq.s32.totalorder %s13, 0
    %p122 = por %p120, %p121
    %p123 = scmp.ne.s32.totalorder %s115, %s117
    %p124 = scmp.eq.s32.totalorder %s18, 1
    %p125 = por %p123, %p124
    %p126 = scmp.ne.s32.totalorder %s117, %s118
    %p127 = scmp.eq.s32.totalorder %s18, 0
    %p128 = por %p126, %p127
    %p129 = scmp.ne.s32.totalorder %s117, %s118
    %p130 = scmp.eq.s32.totalorder %s19, 1
    %p131 = por %p129, %p130
    %p133 = scmp.ne.s32.totalorder %s118, %s132
    %p134 = scmp.eq.s32.totalorder %s19, 0
    %p135 = por %p133, %p134
    %s136 = ssub.s32 %s13, %s20
    %p137 = scmp.eq.s32.totalorder %s136, 0
    %s139 = sadd.s32 %s138, 1
    %s140 = scalar_select %p137, %s138, %s139
    %p143 = pneg %p137
    %p144 = scmp.eq.s32.totalorder %s13, 1
    %p145 = por %p143, %p144
    %p146 = scmp.ne.s32.totalorder %s138, %s141
    %p147 = scmp.eq.s32.totalorder %s13, 0
    %p148 = por %p146, %p147
    %p149 = scmp.ne.s32.totalorder %s138, %s141
    %p150 = scmp.eq.s32.totalorder %s18, 1
    %p151 = por %p149, %p150
    %p152 = scmp.ne.s32.totalorder %s141, %s142
    %p153 = scmp.eq.s32.totalorder %s18, 0
    %p154 = por %p152, %p153
    %p155 = scmp.ne.s32.totalorder %s141, %s142
    %p156 = scmp.eq.s32.totalorder %s19, 1
    %p157 = por %p155, %p156
    %p159 = scmp.ne.s32.totalorder %s142, %s158
    %p160 = scmp.eq.s32.totalorder %s19, 0
    %p161 = por %p159, %p160
    %s163 = sadd.s32 %s162, 1
    %p166 = scmp.eq.s32.totalorder %s13, 1
    %p167 = scmp.ne.s32.totalorder %s162, %s164
    %p168 = scmp.eq.s32.totalorder %s13, 0
    %p169 = por %p167, %p168
    %p170 = scmp.ne.s32.totalorder %s162, %s164
    %p171 = scmp.eq.s32.totalorder %s18, 1
    %p172 = por %p170, %p171
    %p173 = scmp.ne.s32.totalorder %s164, %s165
    %p174 = scmp.eq.s32.totalorder %s18, 0
    %p175 = por %p173, %p174
    %p176 = scmp.ne.s32.totalorder %s164, %s165
    %p177 = scmp.eq.s32.totalorder %s19, 1
    %p178 = por %p176, %p177
    %p180 = scmp.ne.s32.totalorder %s165, %s179
    %p181 = scmp.eq.s32.totalorder %s19, 0
    %p182 = por %p180, %p181
    %p183 = scmp.le.s32.totalorder 1, %s13
    %p184 = scmp.lt.s32.totalorder %s13, 3
    %p185 = pnand %p183, %p184
    %p186 = pneg %p185
    // Predicated region
    $region9: #{residual_block.3} parent=5 // pred_check
      _
    $region10: #{residual_block.3} parent=5 // pred_check_branch
      %188 = sbr.rel (%p185) target = $region12
    $region11: #{residual_block.3} parent=5 // pred_region
      %s189 = ssub.s32 %s13, 1
      // Predicated region
      $region13: #{residual_block.3} parent=11 // pred_check
        %p190 = pneg %p60
      $region14: #{residual_block.3} parent=11 // pred_check_branch
        %192 = sbr.rel (%p190) target = $region16
      $region15: #{residual_block.3} parent=11 // pred_region
        _
      $region16: #{residual_block.3} parent=11 // pred_fallthru
        _
      // Predicated region
      $region17: #{residual_block.3} parent=11 // pred_check
        %p193 = pneg %p81
      $region18: #{residual_block.3} parent=11 // pred_check_branch
        %195 = sbr.rel (%p193) target = $region20
      $region19: #{residual_block.3} parent=11 // pred_region
        _
      $region20: #{residual_block.3} parent=11 // pred_fallthru
        _
    $region12: #{residual_block.3} parent=5 // pred_fallthru
      _
    %p196 = scmp.lt.s32.totalorder %s13, 2
    // Predicated region
    $region21: #{residual_block.3} parent=5 // pred_check
      %p197 = pneg %p196
    $region22: #{residual_block.3} parent=5 // pred_check_branch
      %199 = sbr.rel (%p197) target = $region24
    $region23: #{residual_block.3} parent=5 // pred_region
      // Predicated region
      $region25: #{residual_block.3} parent=23 // pred_check
        %p200 = pneg %p33
      $region26: #{residual_block.3} parent=23 // pred_check_branch
        %202 = sbr.rel (%p200) target = $region28
      $region27: #{residual_block.3} parent=23 // pred_region
        %p203 = scmp.lt.s32.totalorder %s13, 1
        %s204 = scalar_select %p203, %s13, 1
        %s205 = smul.addr %s204, 3
        %s206 = smul.addr %s205, 4
        %s207 = scalar_lea.vmem %s0, %s206
      $region28: #{residual_block.3} parent=23 // pred_fallthru
        _
    $region24: #{residual_block.3} parent=5 // pred_fallthru
      _
    %p208 = scmp.le.s32.totalorder 1, %s13
    %p209 = scmp.lt.s32.totalorder %s13, 3
    %p210 = pnand %p208, %p209
    %p211 = pneg %p210
    // Predicated region
    $region29: #{residual_block.3} parent=5 // pred_check
      _
    $region30: #{residual_block.3} parent=5 // pred_check_branch
      %213 = sbr.rel (%p210) target = $region32
    $region31: #{residual_block.3} parent=5 // pred_region
      %s214 = ssub.s32 %s13, 1
      %p215 = scmp.lt.s32.totalorder %s18, 1
      %s216 = scalar_select %p215, %s18, 1
      %s217 = smul.addr %s216, 3
      %s218 = smul.addr %s217, 4
      %s219 = scalar_lea.vmem %s0, %s218
      %p220 = pneg %p39
      %p221 = pneg %p36
      %p222 = pneg %p60
      %p223 = pneg %p57
      %p224 = pneg %p81
      %p225 = pneg %p78
      %p226 = pneg %p107
      %p227 = pneg %p104
      %p228 = scmp.lt.s32.totalorder %s18, 1
      %s229 = scalar_select %p228, %s18, 1
      %s230 = smul.addr %s229, 2
      %s231 = smul.addr %s230, 4
      %s232 = scalar_lea.vmem %s3, %s231
      %p233 = pneg %p128
      %p234 = pneg %p125
      %p235 = pneg %p154
      %p236 = pneg %p151
      %p237 = scmp.lt.s32.totalorder %s18, 1
      %s238 = scalar_select %p237, %s18, 1
      %s239 = smul.addr %s238, 2
      %s240 = smul.addr %s239, 4
      %s241 = scalar_lea.vmem %s5, %s240
      %p242 = pneg %p175
      %p243 = pneg %p172
      %p244 = scmp.lt.s32.totalorder %s18, 1
      %s245 = scalar_select %p244, %s18, 1
      %s246 = smul.addr %s245, 3
      %s247 = smul.addr %s246, 4
      %s248 = scalar_lea.vmem %s0, %s247
      %p249 = scmp.lt.s32.totalorder %s18, 1
      %s250 = scalar_select %p249, %s18, 1
      %s251 = smul.addr %s250, 2
      %s252 = smul.addr %s251, 4
      %s253 = scalar_lea.vmem %s3, %s252
      %p254 = scmp.lt.s32.totalorder %s18, 1
      %s255 = scalar_select %p254, %s18, 1
      %s256 = smul.addr %s255, 2
      %s257 = smul.addr %s256, 4
      %s258 = scalar_lea.vmem %s5, %s257
      %v260 = vld [vmem:[%s248] sm:$0xf]
      %v261 = vld [vmem:[%s248 + $0x4] sm:$0xf]
      %v262 = vld [vmem:[%s1] sm:$0xf]
      %v263 = vld [vmem:[%s1 + $0x4] sm:$0xf]
      %v264 = vld [vmem:[%s1 + $0x8] sm:$0xf]
      %v265 = vld [vmem:[%s1 + $0xc] sm:$0xf]
      %v266 = vld [vmem:[%s1 + $0x10] sm:$0xf]
      %v267 = vld [vmem:[%s1 + $0x14] sm:$0xf]
      %v268 = vld [vmem:[%s1 + $0x18] sm:$0xf]
      %v269 = vld [vmem:[%s1 + $0x1c] sm:$0xf]
      %v270 = vld [vmem:[%s1 + $0x20] sm:$0xf]
      %v271 = vld [vmem:[%s1 + $0x24] sm:$0xf]
      %v272 = vld [vmem:[%s1 + $0x28] sm:$0xf]
      %v273 = vld [vmem:[%s1 + $0x2c] sm:$0xf]
      %v274 = vld [vmem:[%s1 + $0x30] sm:$0xf]
      %v275 = vld [vmem:[%s1 + $0x34] sm:$0xf]
      %v276 = vld [vmem:[%s1 + $0x38] sm:$0xf]
      %v277 = vld [vmem:[%s1 + $0x3c] sm:$0xf]
      %v278 = vld [vmem:[%s248 + $0x8] sm:$0x1]
      %s279 = scalar_lea.vmem %s1, 64
      %v280 = vld [vmem:[%s279] sm:$0xf]
      %v281 = vld [vmem:[%s279 + $0x4] sm:$0xf]
      %v282 = vld [vmem:[%s279 + $0x8] sm:$0xf]
      %v283 = vld [vmem:[%s279 + $0xc] sm:$0xf]
      %v284 = vld [vmem:[%s279 + $0x10] sm:$0xf]
      %v285 = vld [vmem:[%s279 + $0x14] sm:$0xf]
      %v286 = vld [vmem:[%s279 + $0x18] sm:$0xf]
      %v287 = vld [vmem:[%s279 + $0x1c] sm:$0xf]
      %v288 = vld [vmem:[%s279 + $0x20] sm:$0xf]
      %v289 = vld [vmem:[%s279 + $0x24] sm:$0xf]
      %v290 = vld [vmem:[%s279 + $0x28] sm:$0xf]
      %v291 = vld [vmem:[%s279 + $0x2c] sm:$0xf]
      %v292 = vld [vmem:[%s279 + $0x30] sm:$0xf]
      %v293 = vld [vmem:[%s279 + $0x34] sm:$0xf]
      %v294 = vld [vmem:[%s279 + $0x38] sm:$0xf]
      %v295 = vld [vmem:[%s279 + $0x3c] sm:$0xf]
      %v299 = vunpack.c.l.b16 %v260
      %v300 = vunpack.c.l.b16 %v261
      %v301 = vunpack.c.l.b16 %v278
      %v302 = vpack.c.b16 %v300, %v299
      %v303 = vpack.c.b16 %v301, %v301
      %vm304 = vsmask.f32 7424
      %v306 = vshrl.u32 %v302, 16
      %v308 = vshll.u32 %v302, 16
      %v310 = vrot.slane %v308, 1
      %v311 = vor.u32 %v306, %v310
      %v313 = vshll.u32 %v303, 16
      %v315 = vrot.slane %v313, 1
      %v316 = vsel %vm304, %v311, %v315
      %v334 = vunpack.c.l.b16 %v280
      %v335 = vunpack.c.l.b16 %v281
      %v336 = vunpack.c.l.b16 %v282
      %v337 = vunpack.c.l.b16 %v283
      %v338 = vunpack.c.l.b16 %v284
      %v339 = vunpack.c.l.b16 %v285
      %v340 = vunpack.c.l.b16 %v286
      %v341 = vunpack.c.l.b16 %v287
      %v342 = vunpack.c.l.b16 %v288
      %v343 = vunpack.c.l.b16 %v289
      %v344 = vunpack.c.l.b16 %v290
      %v345 = vunpack.c.l.b16 %v291
      %v346 = vunpack.c.l.b16 %v292
      %v347 = vunpack.c.l.b16 %v293
      %v348 = vunpack.c.l.b16 %v294
      %v349 = vunpack.c.l.b16 %v295
      %v350 = vpack.c.b16 %v335, %v334
      %v351 = vpack.c.b16 %v337, %v336
      %v352 = vpack.c.b16 %v339, %v338
      %v353 = vpack.c.b16 %v341, %v340
      %v354 = vpack.c.b16 %v343, %v342
      %v355 = vpack.c.b16 %v345, %v344
      %v356 = vpack.c.b16 %v347, %v346
      %v357 = vpack.c.b16 %v349, %v348
      %366 = vmatprep.subr.bf16.mxu0 0
      %367 = vmatpush1.bf16.msra.mxu0 %v350
      %368 = vmatprep.subr.bf16.mxu0 0
      %369 = vmatpush1.bf16.msra.mxu0 %v351
      %370 = vmatprep.subr.bf16.mxu0 0
      %371 = vmatpush1.bf16.msra.mxu0 %v352
      %372 = vmatprep.subr.bf16.mxu0 0
      %373 = vmatpush1.bf16.msra.mxu0 %v353
      %374 = vmatprep.subr.bf16.mxu0 0
      %375 = vmatpush1.bf16.msra.mxu0 %v354
      %376 = vmatprep.subr.bf16.mxu0 0
      %377 = vmatpush1.bf16.msra.mxu0 %v355
      %378 = vmatprep.subr.bf16.mxu0 0
      %379 = vmatpush1.bf16.msra.mxu0 %v356
      %380 = vmatprep.subr.bf16.mxu0 0
      %381 = vmatpush1.bf16.msra.mxu0 %v357
      %382 = vmatprep.subr.bf16.mxu0 0
      %383 = vmatpush1.bf16.msra.mxu0 0
      %384 = vmatprep.subr.bf16.mxu0 0
      %385 = vmatpush1.bf16.msra.mxu0 0
      %386 = vmatprep.subr.bf16.mxu0 0
      %387 = vmatpush1.bf16.msra.mxu0 0
      %388 = vmatprep.subr.bf16.mxu0 0
      %389 = vmatpush1.bf16.msra.mxu0 0
      %390 = vmatprep.subr.bf16.mxu0 0
      %391 = vmatpush1.bf16.msra.mxu0 0
      %392 = vmatprep.subr.bf16.mxu0 0
      %393 = vmatpush1.bf16.msra.mxu0 0
      %394 = vmatprep.subr.bf16.mxu0 0
      %395 = vmatpush1.bf16.msra.mxu0 0
      %396 = vmatprep.subr.bf16.mxu0 0
      %397 = vmatpush1.bf16.msra.mxu0 0
      %398 = vmatprep.mubr.bf16.mxu0 0
      %399 = vmatmul.mubr.bf16.gmra.mrb[0].mxu0 %v316
      %v400 = vpop.f32.mrb[0].mxu0
      %v401 = vadd.f32 0.0, %v400
      %v402 = vpop.f32.mrb[0].mxu0
      %v403 = vpop.f32.mrb[0].mxu0
      %v404 = vadd.f32 0.0, %v403
      %v405 = vpop.f32.mrb[0].mxu0
      %406 = vdwg.mxu0
      %v424 = vunpack.c.l.b16 %v262
      %v425 = vunpack.c.l.b16 %v263
      %v426 = vunpack.c.l.b16 %v264
      %v427 = vunpack.c.l.b16 %v265
      %v428 = vunpack.c.l.b16 %v266
      %v429 = vunpack.c.l.b16 %v267
      %v430 = vunpack.c.l.b16 %v268
      %v431 = vunpack.c.l.b16 %v269
      %v432 = vunpack.c.l.b16 %v270
      %v433 = vunpack.c.l.b16 %v271
      %v434 = vunpack.c.l.b16 %v272
      %v435 = vunpack.c.l.b16 %v273
      %v436 = vunpack.c.l.b16 %v274
      %v437 = vunpack.c.l.b16 %v275
      %v438 = vunpack.c.l.b16 %v276
      %v439 = vunpack.c.l.b16 %v277
      %v440 = vpack.c.b16 %v425, %v424
      %v441 = vpack.c.b16 %v427, %v426
      %v442 = vpack.c.b16 %v429, %v428
      %v443 = vpack.c.b16 %v431, %v430
      %v444 = vpack.c.b16 %v433, %v432
      %v445 = vpack.c.b16 %v435, %v434
      %v446 = vpack.c.b16 %v437, %v436
      %v447 = vpack.c.b16 %v439, %v438
      %456 = vmatprep.subr.bf16.mxu0 0
      %457 = vmatpush1.bf16.msra.mxu0 %v440
      %458 = vmatprep.subr.bf16.mxu0 0
      %459 = vmatpush1.bf16.msra.mxu0 %v441
      %460 = vmatprep.subr.bf16.mxu0 0
      %461 = vmatpush1.bf16.msra.mxu0 %v442
      %462 = vmatprep.subr.bf16.mxu0 0
      %463 = vmatpush1.bf16.msra.mxu0 %v443
      %464 = vmatprep.subr.bf16.mxu0 0
      %465 = vmatpush1.bf16.msra.mxu0 %v444
      %466 = vmatprep.subr.bf16.mxu0 0
      %467 = vmatpush1.bf16.msra.mxu0 %v445
      %468 = vmatprep.subr.bf16.mxu0 0
      %469 = vmatpush1.bf16.msra.mxu0 %v446
      %470 = vmatprep.subr.bf16.mxu0 0
      %471 = vmatpush1.bf16.msra.mxu0 %v447
      %472 = vmatprep.subr.bf16.mxu0 0
      %473 = vmatpush1.bf16.msra.mxu0 0
      %474 = vmatprep.subr.bf16.mxu0 0
      %475 = vmatpush1.bf16.msra.mxu0 0
      %476 = vmatprep.subr.bf16.mxu0 0
      %477 = vmatpush1.bf16.msra.mxu0 0
      %478 = vmatprep.subr.bf16.mxu0 0
      %479 = vmatpush1.bf16.msra.mxu0 0
      %480 = vmatprep.subr.bf16.mxu0 0
      %481 = vmatpush1.bf16.msra.mxu0 0
      %482 = vmatprep.subr.bf16.mxu0 0
      %483 = vmatpush1.bf16.msra.mxu0 0
      %484 = vmatprep.subr.bf16.mxu0 0
      %485 = vmatpush1.bf16.msra.mxu0 0
      %486 = vmatprep.subr.bf16.mxu0 0
      %487 = vmatpush1.bf16.msra.mxu0 0
      %488 = vmatprep.mubr.bf16.mxu0 0
      %489 = vmatmul.mubr.bf16.gmra.mrb[0].mxu0 %v302
      %v490 = vpop.f32.mrb[0].mxu0
      %v491 = vadd.f32 %v401, %v490
      %v492 = vpop.f32.mrb[0].mxu0
      %v493 = vpop.f32.mrb[0].mxu0
      %v494 = vadd.f32 %v404, %v493
      %v495 = vpop.f32.mrb[0].mxu0
      %496 = vdwg.mxu0
      %v497 = vld [vmem:[%s248] sm:$0xe]
      %s498 = scalar_lea.vmem %s1, 128
      %v499 = vld [vmem:[%s498] sm:$0xf]
      %v500 = vld [vmem:[%s498 + $0x4] sm:$0xf]
      %v501 = vld [vmem:[%s498 + $0x8] sm:$0xf]
      %v502 = vld [vmem:[%s498 + $0xc] sm:$0xf]
      %v503 = vld [vmem:[%s498 + $0x10] sm:$0xf]
      %v504 = vld [vmem:[%s498 + $0x14] sm:$0xf]
      %v505 = vld [vmem:[%s498 + $0x18] sm:$0xf]
      %v506 = vld [vmem:[%s498 + $0x1c] sm:$0xf]
      %v507 = vld [vmem:[%s498 + $0x20] sm:$0xf]
      %v508 = vld [vmem:[%s498 + $0x24] sm:$0xf]
      %v509 = vld [vmem:[%s498 + $0x28] sm:$0xf]
      %v510 = vld [vmem:[%s498 + $0x2c] sm:$0xf]
      %v511 = vld [vmem:[%s498 + $0x30] sm:$0xf]
      %v512 = vld [vmem:[%s498 + $0x34] sm:$0xf]
      %v513 = vld [vmem:[%s498 + $0x38] sm:$0xf]
      %v514 = vld [vmem:[%s498 + $0x3c] sm:$0xf]
      %v516 = vunpack.c.l.b16 %v497
      %v517 = vpack.c.b16 %v300, %v516
      %vm518 = vcmask 1046528
      %v519 = vrot.slane %v517, 1
      %v520 = vrot.slane %v303, 1
      %v521 = vsel %vm518, %v519, %v520
      %v539 = vunpack.c.l.b16 %v499
      %v540 = vunpack.c.l.b16 %v500
      %v541 = vunpack.c.l.b16 %v501
      %v542 = vunpack.c.l.b16 %v502
      %v543 = vunpack.c.l.b16 %v503
      %v544 = vunpack.c.l.b16 %v504
      %v545 = vunpack.c.l.b16 %v505
      %v546 = vunpack.c.l.b16 %v506
      %v547 = vunpack.c.l.b16 %v507
      %v548 = vunpack.c.l.b16 %v508
      %v549 = vunpack.c.l.b16 %v509
      %v550 = vunpack.c.l.b16 %v510
      %v551 = vunpack.c.l.b16 %v511
      %v552 = vunpack.c.l.b16 %v512
      %v553 = vunpack.c.l.b16 %v513
      %v554 = vunpack.c.l.b16 %v514
      %v555 = vpack.c.b16 %v540, %v539
      %v556 = vpack.c.b16 %v542, %v541
      %v557 = vpack.c.b16 %v544, %v543
      %v558 = vpack.c.b16 %v546, %v545
      %v559 = vpack.c.b16 %v548, %v547
      %v560 = vpack.c.b16 %v550, %v549
      %v561 = vpack.c.b16 %v552, %v551
      %v562 = vpack.c.b16 %v554, %v553
      %571 = vmatprep.subr.bf16.mxu0 0
      %572 = vmatpush1.bf16.msra.mxu0 %v555
      %573 = vmatprep.subr.bf16.mxu0 0
      %574 = vmatpush1.bf16.msra.mxu0 %v556
      %575 = vmatprep.subr.bf16.mxu0 0
      %576 = vmatpush1.bf16.msra.mxu0 %v557
      %577 = vmatprep.subr.bf16.mxu0 0
      %578 = vmatpush1.bf16.msra.mxu0 %v558
      %579 = vmatprep.subr.bf16.mxu0 0
      %580 = vmatpush1.bf16.msra.mxu0 %v559
      %581 = vmatprep.subr.bf16.mxu0 0
      %582 = vmatpush1.bf16.msra.mxu0 %v560
      %583 = vmatprep.subr.bf16.mxu0 0
      %584 = vmatpush1.bf16.msra.mxu0 %v561
      %585 = vmatprep.subr.bf16.mxu0 0
      %586 = vmatpush1.bf16.msra.mxu0 %v562
      %587 = vmatprep.subr.bf16.mxu0 0
      %588 = vmatpush1.bf16.msra.mxu0 0
      %589 = vmatprep.subr.bf16.mxu0 0
      %590 = vmatpush1.bf16.msra.mxu0 0
      %591 = vmatprep.subr.bf16.mxu0 0
      %592 = vmatpush1.bf16.msra.mxu0 0
      %593 = vmatprep.subr.bf16.mxu0 0
      %594 = vmatpush1.bf16.msra.mxu0 0
      %595 = vmatprep.subr.bf16.mxu0 0
      %596 = vmatpush1.bf16.msra.mxu0 0
      %597 = vmatprep.subr.bf16.mxu0 0
      %598 = vmatpush1.bf16.msra.mxu0 0
      %599 = vmatprep.subr.bf16.mxu0 0
      %600 = vmatpush1.bf16.msra.mxu0 0
      %601 = vmatprep.subr.bf16.mxu0 0
      %602 = vmatpush1.bf16.msra.mxu0 0
      %603 = vmatprep.mubr.bf16.mxu0 0
      %604 = vmatmul.mubr.bf16.gmra.mrb[0].mxu0 %v521
      %v605 = vpop.f32.mrb[0].mxu0
      %v606 = vadd.f32 0.0, %v605
      %v607 = vpop.f32.mrb[0].mxu0
      %v608 = vpop.f32.mrb[0].mxu0
      %v609 = vadd.f32 0.0, %v608
      %v610 = vpop.f32.mrb[0].mxu0
      %611 = vdwg.mxu0
      %v612 = vadd.f32 %v491, %v606
      %v613 = vadd.f32 %v494, %v609
      %v614 = vpack.c.bf16 %v613, %v612
      %v616 = vunpack.c.l.b16 %v614
      %v617 = vunpack.c.h.b16 %v614
      %v618 = vpack.c.b16 %v616, %v616
      %v619 = vpack.c.b16 %v617, %v617
      %622 = vst [vmem:[%s253] sm:$0xf] %v618
      %623 = vst [vmem:[%s253 + $0x4] sm:$0xf] %v619
      %v624 = vadd.f32 %v612, %v613
      %v625 = vrot.slane %v624, 4
      %v626 = vadd.f32 %v624, %v625
      %v627 = vrot.slane %v626, 2
      %v628 = vadd.f32 %v626, %v627
      %v629 = vrot.slane %v628, 1
      %v630 = vadd.f32 %v628, %v629
      %v631 = vmul.f32 %v630, 0.0625
      %v632 = vsub.f32 %v612, %v631
      %v633 = vsub.f32 %v613, %v631
      %v634 = vmul.f32 %v632, %v632
      %v635 = vmul.f32 %v633, %v633
      %v636 = vadd.f32 %v634, %v635
      %v637 = vrot.slane %v636, 4
      %v638 = vadd.f32 %v636, %v637
      %v639 = vrot.slane %v638, 2
      %v640 = vadd.f32 %v638, %v639
      %v641 = vrot.slane %v640, 1
      %v642 = vadd.f32 %v640, %v641
      %p643 = scmp.eq.s32.totalorder %s18, 0
      // Predicated region
      $region33: #{residual_block.3} parent=31 // pred_check
        %p644 = pneg %p643
      $region34: #{residual_block.3} parent=31 // pred_check_branch
        %646 = sbr.rel (%p644) target = $region36
      $region35: #{residual_block.3} parent=31 // pred_region
        %647 = vst [vmem:[%s4] sm:$0x1] %v631
        %648 = vst [vmem:[%s4 + $0x1] sm:$0x1] %v642
      $region36: #{residual_block.3} parent=31 // pred_fallthru
        _
      %p649 = scmp.gt.s32.totalorder %s18, 0
      // Predicated region
      $region37: #{residual_block.3} parent=31 // pred_check
        %p650 = pneg %p649
      $region38: #{residual_block.3} parent=31 // pred_check_branch
        %652 = sbr.rel (%p650) target = $region40
      $region39: #{residual_block.3} parent=31 // pred_region
        %s653 = smul.u32 %s18, 16
        %s654 = scvt.s32.f32 %s653
        %s655 = sadd.f32 %s654, 16.0
        %v656 = vstv %s655
        %v657 = vrcp.pop %v656
        %s658 = vtos %v657
        %s659 = smul.f32 16.0, %s658
        %v660 = vld [vmem:[%s4] sm:$0x1]
        %v661 = vsub.f32 %v631, %v660
        %v662 = vstv %s659
        %v663 = vmul.f32 %v661, %v662
        %v664 = vadd.f32 %v660, %v663
        %665 = vst [vmem:[%s4] sm:$0x1] %v664
        %v666 = vld [vmem:[%s4 + $0x1] sm:$0x1]
        %v667 = vadd.f32 %v666, %v642
        %v668 = vmul.f32 %v661, %v661
        %s669 = smul.f32 %s654, %s659
        %v670 = vstv %s669
        %v671 = vmul.f32 %v668, %v670
        %v672 = vadd.f32 %v667, %v671
        %673 = vst [vmem:[%s4 + $0x1] sm:$0x1] %v672
      $region40: #{residual_block.3} parent=31 // pred_fallthru
        _
      %p674 = scmp.eq.s32.totalorder %s18, 1
      // Predicated region
      $region41: #{residual_block.3} parent=31 // pred_check
        %p675 = pneg %p674
      $region42: #{residual_block.3} parent=31 // pred_check_branch
        %677 = sbr.rel (%p675) target = $region44
      $region43: #{residual_block.3} parent=31 // pred_region
        %v678 = vld [vmem:[%s4 + $0x1] sm:$0x1]
        %v679 = vmul.f32 %v678, 0.03125
        %v680 = vmax.f32 %v679, 0.0
        %681 = vst [vmem:[%s4 + $0x1] sm:$0x1] %v680
      $region44: #{residual_block.3} parent=31 // pred_fallthru
        _
      %v682 = vld [vmem:[%s248] sm:$0xf]
      %v683 = vld [vmem:[%s248 + $0x4] sm:$0xf]
      %v684 = vld [vmem:[%s248 + $0x8] sm:$0x1]
      %v685 = vld [vmem:[%s2] sm:$0xf]
      %v686 = vld [vmem:[%s2 + $0x4] sm:$0xf]
      %v687 = vld [vmem:[%s2 + $0x8] sm:$0xf]
      %v688 = vld [vmem:[%s2 + $0xc] sm:$0xf]
      %v689 = vld [vmem:[%s2 + $0x10] sm:$0xf]
      %v690 = vld [vmem:[%s2 + $0x14] sm:$0xf]
      %v691 = vld [vmem:[%s2 + $0x18] sm:$0xf]
      %v692 = vld [vmem:[%s2 + $0x1c] sm:$0xf]
      %v693 = vld [vmem:[%s2 + $0x20] sm:$0xf]
      %v694 = vld [vmem:[%s2 + $0x24] sm:$0xf]
      %v695 = vld [vmem:[%s2 + $0x28] sm:$0xf]
      %v696 = vld [vmem:[%s2 + $0x2c] sm:$0xf]
      %v697 = vld [vmem:[%s2 + $0x30] sm:$0xf]
      %v698 = vld [vmem:[%s2 + $0x34] sm:$0xf]
      %v699 = vld [vmem:[%s2 + $0x38] sm:$0xf]
      %v700 = vld [vmem:[%s2 + $0x3c] sm:$0xf]
      %v704 = vunpack.c.l.b16 %v682
      %v705 = vunpack.c.l.b16 %v683
      %v706 = vunpack.c.l.b16 %v684
      %v707 = vpack.c.b16 %v705, %v704
      %v708 = vpack.c.b16 %v706, %v706
      %v710 = vshrl.u32 %v707, 16
      %v712 = vshll.u32 %v707, 16
      %v714 = vrot.slane %v712, 1
      %v715 = vor.u32 %v710, %v714
      %v717 = vshll.u32 %v708, 16
      %v719 = vrot.slane %v717, 1
      %v720 = vsel %vm304, %v715, %v719
      %v738 = vunpack.c.l.b16 %v685
      %v739 = vunpack.c.l.b16 %v686
      %v740 = vunpack.c.l.b16 %v687
      %v741 = vunpack.c.l.b16 %v688
      %v742 = vunpack.c.l.b16 %v689
      %v743 = vunpack.c.l.b16 %v690
      %v744 = vunpack.c.l.b16 %v691
      %v745 = vunpack.c.l.b16 %v692
      %v746 = vunpack.c.l.b16 %v693
      %v747 = vunpack.c.l.b16 %v694
      %v748 = vunpack.c.l.b16 %v695
      %v749 = vunpack.c.l.b16 %v696
      %v750 = vunpack.c.l.b16 %v697
      %v751 = vunpack.c.l.b16 %v698
      %v752 = vunpack.c.l.b16 %v699
      %v753 = vunpack.c.l.b16 %v700
      %v754 = vpack.c.b16 %v739, %v738
      %v755 = vpack.c.b16 %v741, %v740
      %v756 = vpack.c.b16 %v743, %v742
      %v757 = vpack.c.b16 %v745, %v744
      %v758 = vpack.c.b16 %v747, %v746
      %v759 = vpack.c.b16 %v749, %v748
      %v760 = vpack.c.b16 %v751, %v750
      %v761 = vpack.c.b16 %v753, %v752
      %770 = vmatprep.subr.bf16.mxu0 0
      %771 = vmatpush1.bf16.msra.mxu0 %v754
      %772 = vmatprep.subr.bf16.mxu0 0
      %773 = vmatpush1.bf16.msra.mxu0 %v755
      %774 = vmatprep.subr.bf16.mxu0 0
      %775 = vmatpush1.bf16.msra.mxu0 %v756
      %776 = vmatprep.subr.bf16.mxu0 0
      %777 = vmatpush1.bf16.msra.mxu0 %v757
      %778 = vmatprep.subr.bf16.mxu0 0
      %779 = vmatpush1.bf16.msra.mxu0 %v758
      %780 = vmatprep.subr.bf16.mxu0 0
      %781 = vmatpush1.bf16.msra.mxu0 %v759
      %782 = vmatprep.subr.bf16.mxu0 0
      %783 = vmatpush1.bf16.msra.mxu0 %v760
      %784 = vmatprep.subr.bf16.mxu0 0
      %785 = vmatpush1.bf16.msra.mxu0 %v761
      %786 = vmatprep.subr.bf16.mxu0 0
      %787 = vmatpush1.bf16.msra.mxu0 0
      %788 = vmatprep.subr.bf16.mxu0 0
      %789 = vmatpush1.bf16.msra.mxu0 0
      %790 = vmatprep.subr.bf16.mxu0 0
      %791 = vmatpush1.bf16.msra.mxu0 0
      %792 = vmatprep.subr.bf16.mxu0 0
      %793 = vmatpush1.bf16.msra.mxu0 0
      %794 = vmatprep.subr.bf16.mxu0 0
      %795 = vmatpush1.bf16.msra.mxu0 0
      %796 = vmatprep.subr.bf16.mxu0 0
      %797 = vmatpush1.bf16.msra.mxu0 0
      %798 = vmatprep.subr.bf16.mxu0 0
      %799 = vmatpush1.bf16.msra.mxu0 0
      %800 = vmatprep.subr.bf16.mxu0 0
      %801 = vmatpush1.bf16.msra.mxu0 0
      %802 = vmatprep.mubr.bf16.mxu0 0
      %803 = vmatmul.mubr.bf16.gmra.mrb[0].mxu0 %v720
      %v804 = vpop.f32.mrb[0].mxu0
      %v805 = vadd.f32 0.0, %v804
      %v806 = vpop.f32.mrb[0].mxu0
      %v807 = vpop.f32.mrb[0].mxu0
      %v808 = vadd.f32 0.0, %v807
      %v809 = vpop.f32.mrb[0].mxu0
      %810 = vdwg.mxu0
      %v811 = vpack.c.bf16 %v808, %v805
      %v813 = vunpack.c.l.b16 %v811
      %v814 = vunpack.c.h.b16 %v811
      %v815 = vpack.c.b16 %v813, %v813
      %v816 = vpack.c.b16 %v814, %v814
      %819 = vst [vmem:[%s258] sm:$0xf] %v815
      %820 = vst [vmem:[%s258 + $0x4] sm:$0xf] %v816
      %v821 = vadd.f32 %v805, %v808
      %v822 = vrot.slane %v821, 4
      %v823 = vadd.f32 %v821, %v822
      %v824 = vrot.slane %v823, 2
      %v825 = vadd.f32 %v823, %v824
      %v826 = vrot.slane %v825, 1
      %v827 = vadd.f32 %v825, %v826
      %v828 = vmul.f32 %v827, 0.0625
      %v829 = vsub.f32 %v805, %v828
      %v830 = vsub.f32 %v808, %v828
      %v831 = vmul.f32 %v829, %v829
      %v832 = vmul.f32 %v830, %v830
      %v833 = vadd.f32 %v831, %v832
      %v834 = vrot.slane %v833, 4
      %v835 = vadd.f32 %v833, %v834
      %v836 = vrot.slane %v835, 2
      %v837 = vadd.f32 %v835, %v836
      %v838 = vrot.slane %v837, 1
      %v839 = vadd.f32 %v837, %v838
      // Predicated region
      $region45: #{residual_block.3} parent=31 // pred_check
        %p840 = pneg %p643
      $region46: #{residual_block.3} parent=31 // pred_check_branch
        %842 = sbr.rel (%p840) target = $region48
      $region47: #{residual_block.3} parent=31 // pred_region
        %843 = vst [vmem:[%s6] sm:$0x1] %v828
        %844 = vst [vmem:[%s6 + $0x1] sm:$0x1] %v839
      $region48: #{residual_block.3} parent=31 // pred_fallthru
        _
      // Predicated region
      $region49: #{residual_block.3} parent=31 // pred_check
        %p845 = pneg %p649
      $region50: #{residual_block.3} parent=31 // pred_check_branch
        %847 = sbr.rel (%p845) target = $region52
      $region51: #{residual_block.3} parent=31 // pred_region
        %s848 = smul.u32 %s18, 16
        %s849 = scvt.s32.f32 %s848
        %s850 = sadd.f32 %s849, 16.0
        %v851 = vstv %s850
        %v852 = vrcp.pop %v851
        %s853 = vtos %v852
        %s854 = smul.f32 16.0, %s853
        %v855 = vld [vmem:[%s6] sm:$0x1]
        %v856 = vsub.f32 %v828, %v855
        %v857 = vstv %s854
        %v858 = vmul.f32 %v856, %v857
        %v859 = vadd.f32 %v855, %v858
        %860 = vst [vmem:[%s6] sm:$0x1] %v859
        %v861 = vld [vmem:[%s6 + $0x1] sm:$0x1]
        %v862 = vadd.f32 %v861, %v839
        %v863 = vmul.f32 %v856, %v856
        %s864 = smul.f32 %s849, %s854
        %v865 = vstv %s864
        %v866 = vmul.f32 %v863, %v865
        %v867 = vadd.f32 %v862, %v866
        %868 = vst [vmem:[%s6 + $0x1] sm:$0x1] %v867
      $region52: #{residual_block.3} parent=31 // pred_fallthru
        _
      // Predicated region
      $region53: #{residual_block.3} parent=31 // pred_check
        %p869 = pneg %p674
      $region54: #{residual_block.3} parent=31 // pred_check_branch
        %871 = sbr.rel (%p869) target = $region56
      $region55: #{residual_block.3} parent=31 // pred_region
        %v872 = vld [vmem:[%s6 + $0x1] sm:$0x1]
        %v873 = vmul.f32 %v872, 0.03125
        %v874 = vmax.f32 %v873, 0.0
        %875 = vst [vmem:[%s6 + $0x1] sm:$0x1] %v874
      $region56: #{residual_block.3} parent=31 // pred_fallthru
        _
      %p876 = scmp.lt.s32.totalorder %s18, 1
      %s877 = scalar_select %p876, %s18, 1
      %s878 = smul.addr %s877, 2
      %s879 = smul.addr %s878, 4
      %s880 = scalar_lea.vmem %s3, %s879
      %p881 = scmp.lt.s32.totalorder %s18, 1
      %s882 = scalar_select %p881, %s18, 1
      %s883 = smul.addr %s882, 2
      %s884 = smul.addr %s883, 4
      %s885 = scalar_lea.vmem %s5, %s884
      // Predicated region
      $region57: #{residual_block.3} parent=31 // pred_check
        %p886 = pneg %p104
      $region58: #{residual_block.3} parent=31 // pred_check_branch
        %888 = sbr.rel (%p886) target = $region60
      $region59: #{residual_block.3} parent=31 // pred_region
        _
      $region60: #{residual_block.3} parent=31 // pred_fallthru
        _
      // Predicated region
      $region61: #{residual_block.3} parent=31 // pred_check
        %p889 = pneg %p125
      $region62: #{residual_block.3} parent=31 // pred_check_branch
        %891 = sbr.rel (%p889) target = $region64
      $region63: #{residual_block.3} parent=31 // pred_region
        _
      $region64: #{residual_block.3} parent=31 // pred_fallthru
        _
      // Predicated region
      $region65: #{residual_block.3} parent=31 // pred_check
        %p892 = pneg %p151
      $region66: #{residual_block.3} parent=31 // pred_check_branch
        %894 = sbr.rel (%p892) target = $region68
      $region67: #{residual_block.3} parent=31 // pred_region
        _
      $region68: #{residual_block.3} parent=31 // pred_fallthru
        _
      // Predicated region
      $region69: #{residual_block.3} parent=31 // pred_check
        %p895 = pneg %p172
      $region70: #{residual_block.3} parent=31 // pred_check_branch
        %897 = sbr.rel (%p895) target = $region72
      $region71: #{residual_block.3} parent=31 // pred_region
        _
      $region72: #{residual_block.3} parent=31 // pred_fallthru
        _
      // Predicated region
      $region73: #{residual_block.3} parent=31 // pred_check
        %p898 = pneg %p125
      $region74: #{residual_block.3} parent=31 // pred_check_branch
        %900 = sbr.rel (%p898) target = $region76
      $region75: #{residual_block.3} parent=31 // pred_region
        _
      $region76: #{residual_block.3} parent=31 // pred_fallthru
        _
      // Predicated region
      $region77: #{residual_block.3} parent=31 // pred_check
        %p901 = pneg %p172
      $region78: #{residual_block.3} parent=31 // pred_check_branch
        %903 = sbr.rel (%p901) target = $region80
      $region79: #{residual_block.3} parent=31 // pred_region
        _
      $region80: #{residual_block.3} parent=31 // pred_fallthru
        _
    $region32: #{residual_block.3} parent=5 // pred_fallthru
      _
    %p904 = scmp.le.s32.totalorder 2, %s13
    // Predicated region
    $region81: #{residual_block.3} parent=5 // pred_check
      %p905 = pneg %p904
    $region82: #{residual_block.3} parent=5 // pred_check_branch
      %907 = sbr.rel (%p905) target = $region84
    $region83: #{residual_block.3} parent=5 // pred_region
      %s908 = ssub.s32 %s13, 2
      // Predicated region
      $region85: #{residual_block.3} parent=83 // pred_check
        %p909 = pneg %p110
      $region86: #{residual_block.3} parent=83 // pred_check_branch
        %911 = sbr.rel (%p909) target = $region88
      $region87: #{residual_block.3} parent=83 // pred_region
        %p912 = scmp.lt.s32.totalorder %s19, 1
        %s913 = scalar_select %p912, %s19, 1
        %s914 = smul.addr %s913, 2
        %s915 = smul.addr %s914, 4
        %s916 = scalar_lea.vmem %s3, %s915
      $region88: #{residual_block.3} parent=83 // pred_fallthru
        _
      // Predicated region
      $region89: #{residual_block.3} parent=83 // pred_check
        %p917 = pneg %p157
      $region90: #{residual_block.3} parent=83 // pred_check_branch
        %919 = sbr.rel (%p917) target = $region92
      $region91: #{residual_block.3} parent=83 // pred_region
        %p920 = scmp.lt.s32.totalorder %s19, 1
        %s921 = scalar_select %p920, %s19, 1
        %s922 = smul.addr %s921, 2
        %s923 = smul.addr %s922, 4
        %s924 = scalar_lea.vmem %s5, %s923
      $region92: #{residual_block.3} parent=83 // pred_fallthru
        _
    $region84: #{residual_block.3} parent=5 // pred_fallthru
      _
  $region6: #{residual_block.3} parent=0 // loop_footer
    %s17 = sadd.s32 1, %s13
  $region7: #{residual_block.3} parent=0 // loop_footer_branch
    %12 = sbr.rel target = $region3
  $region8: #{residual_block.3} parent=0 // loop_exit
    _

</llo_original>
